<compile_context>
chip_gen: v7x
topology: tpu7x:2x2x1
jax: 0.10.0
libtpu: 0.0.40
codegen_flags: <defaults>
</compile_context>

<pallas_src>
import functools
import math

import jax
import jax.numpy as jnp
from jax.experimental import pallas as pl
from jax.experimental.pallas import tpu as pltpu


# ----------------------------------------------------------------------------
# Fused IMAB kernel (one grid step per batch block)
# ----------------------------------------------------------------------------
def _make_imab_kernel(num_heads, dim_V):
    dh = dim_V // num_heads

    def mab_block(Qp, kv, mask_b, wkv, bkv, wo, bo, slab_ref):
        # Qp:  (TB, Nq, dim_V) f32, already-projected (unscaled) queries
        # kv:  (TB, Nk, Dk)    f32 key/value source
        # mask_b: (TB, Nq, Nk) bool, True = masked out
        # 1/sqrt(dim_V) is pre-folded into the K half of wkv/bkv.
        TB, Nq, _ = Qp.shape
        Nk, Dk = kv.shape[1], kv.shape[2]

        # Fused K|V projection: one (TB*Nk, Dk) x (Dk, 2V) bf16 MXU matmul.
        kv2 = kv.reshape(TB * Nk, Dk).astype(jnp.bfloat16)
        KV = jnp.dot(kv2, wkv, preferred_element_type=jnp.float32) + bkv
        KV = KV.reshape(TB, Nk, 2 * dim_V)
        Kp = KV[:, :, :dim_V].astype(jnp.bfloat16)
        Vp = KV[:, :, dim_V:].astype(jnp.bfloat16)
        Qb = Qp.astype(jnp.bfloat16)

        # Per-head attention; heads are static lane slices, outputs go into a
        # pre-allocated (TB, Nq, dim_V) VMEM slab (no lane concat at the end).
        for h in range(num_heads):
            sl = slice(h * dh, (h + 1) * dh)
            s = jnp.einsum("bqd,bkd->bqk", Qb[:, :, sl], Kp[:, :, sl],
                           preferred_element_type=jnp.float32)
            s = jnp.where(mask_b, -1e10, s)           # masked_fill semantics
            s = s - jnp.max(s, axis=-1, keepdims=True)
            e = jnp.exp(s)
            inv = pl.reciprocal(jnp.sum(e, axis=-1, keepdims=True), approx=True)
            a = (e * inv).astype(jnp.bfloat16)
            slab_ref[:, :, sl] = jnp.einsum("bqk,bkd->bqd", a, Vp[:, :, sl],
                                            preferred_element_type=jnp.float32)

        O = Qp + slab_ref[...]                        # residual on unscaled Qp
        O2 = O.reshape(TB * Nq, dim_V)
        t = jnp.dot(O2.astype(jnp.bfloat16), wo,
                    preferred_element_type=jnp.float32) + bo
        return O + jnp.maximum(t, 0.0).reshape(TB, Nq, dim_V)   # O + relu(fc_o(O))

    def kernel(x_ref, y_ref, m1_ref, m2_ref,
               qp0_ref, wkv0_ref, wq1_ref, wkv1_ref, wo_ref, b0_ref, b1_ref,
               o_ref, slab0_ref, slab1_ref):
        TB, Nx, dim_in = x_ref.shape
        Ny = y_ref.shape[1]
        Ni = qp0_ref.shape[0]

        # Unpack the consolidated bias rows (sliced once per step).
        bkv0 = b0_ref[:, : 2 * dim_V]
        bo0 = b0_ref[:, 2 * dim_V:]
        bq1 = b1_ref[:, :dim_V]
        bkv1 = b1_ref[:, dim_V: 3 * dim_V]
        bo1 = b1_ref[:, 3 * dim_V:]

        # ---- mab0: H = MAB(I, Y) -------------------------------------------
        # Q projection of the induced points is batch-invariant -> precomputed
        # at pack time (qp0 = I @ wq0^T + bq0); broadcast once per step.
        qp0 = jnp.broadcast_to(qp0_ref[...], (TB, Ni, dim_V))
        mask0 = jnp.broadcast_to(m1_ref[...], (TB, Ni, Ny)) == 0.0   # per-key
        H = mab_block(qp0, y_ref[...], mask0,
                      wkv0_ref[...], bkv0, wo_ref[0], bo0, slab0_ref)

        # ---- mab1: out = MAB(X, H) -----------------------------------------
        x2 = x_ref[...].reshape(TB * Nx, dim_in).astype(jnp.bfloat16)
        qp1 = (jnp.dot(x2, wq1_ref[...], preferred_element_type=jnp.float32)
               + bq1).reshape(TB, Nx, dim_V)
        maskq = jnp.broadcast_to(m2_ref[...], (TB, Nx, Ni)) == 0.0   # per-query
        out = mab_block(qp1, H, maskq,
                        wkv1_ref[...], bkv1, wo_ref[1], bo1, slab1_ref)

        # NOTE(v5e): dim_out=32 < 128 lanes -> masked partial vst is unavoidable
        # unless the model's dim_V is padded to a multiple of 128.
        o_ref[...] = out.astype(o_ref.dtype)

    return kernel


# ----------------------------------------------------------------------------
# Parameter packing (done once, outside the hot path)
# ----------------------------------------------------------------------------
def _pack_kv(p, dim_V):
    scale = 1.0 / math.sqrt(dim_V)
    wkv = jnp.concatenate([p["wk"].T * scale, p["wv"].T], axis=1)   # (Dk, 2V)
    bkv = jnp.concatenate([p["bk"] * scale, p["bv"]])               # (2V,)
    return wkv.astype(jnp.bfloat16), bkv


def pack_imab_params(params, dim_out):
    p0, p1 = params["mab0"], params["mab1"]
    I = params["I"][0]                                              # (num_inds, dim_out)
    qp0 = I @ p0["wq"].T + p0["bq"]                                 # hoisted, f32, unscaled
    wkv0, bkv0 = _pack_kv(p0, dim_out)
    wkv1, bkv1 = _pack_kv(p1, dim_out)
    return dict(
        qp0=qp0,                                                    # (num_inds, V) f32
        wkv0=wkv0,                                                  # (dim_in, 2V) bf16
        wq1=p1["wq"].T.astype(jnp.bfloat16),                        # (dim_in, V)  bf16
        wkv1=wkv1,                                                  # (V, 2V)      bf16
        wo=jnp.stack([p0["wo"].T, p1["wo"].T]).astype(jnp.bfloat16),  # (2, V, V)  bf16
        b0=jnp.concatenate([bkv0, p0["bo"]]).reshape(1, -1),        # (1, 3V) f32
        b1=jnp.concatenate([p1["bq"], bkv1, p1["bo"]]).reshape(1, -1),  # (1, 4V) f32
    )


# ----------------------------------------------------------------------------
# Forward (single pallas_call, batch-blocked grid)
# ----------------------------------------------------------------------------
def imab_forward(X, Y, mask1, mask2, packed, num_heads, num_inds, dim_out,
                 block_b=None):
    """X: (B,Nx,dim_in)  Y: (B,Ny,dim_in)  mask1: (B,Ny)  mask2: (B,Nx)."""
    B, Nx, _ = X.shape
    Ny = Y.shape[1]

    if block_b is None:
        if B <= 2:
            block_b = 1        # keep >=2 grid steps so both v7x TCs get work
        else:
            # largest divisor of B that is <=8 and leaves >=2 grid steps
            block_b = max(d for d in range(1, min(8, B // 2) + 1) if B % d == 0)
    assert B % block_b == 0
    grid = (B // block_b,)

    m1 = mask1.astype(jnp.float32).reshape(B, 1, Ny)    # per-key mask (mab0)
    m2 = mask2.astype(jnp.float32).reshape(B, Nx, 1)    # per-query mask (mab1)

    def batched(arr):                      # tile only the batch axis
        nd = arr.ndim

        def imap(g):
            return (g,) + (0,) * (nd - 1)

        return pl.BlockSpec((block_b,) + arr.shape[1:], imap)

    # Weights/biases: whole array resident every step (constant index_map).
    # TODO(synk): at production dims mark these with pipeline_mode=pl.Buffered(1)
    # (double-buffering a constant-index operand is pure VMEM waste on v7x's 64 MiB).
    def resident(arr):
        nd = arr.ndim

        def imap(g):
            return (0,) * nd

        return pl.BlockSpec(arr.shape, imap)

    operands = (X, Y, m1, m2,
                packed["qp0"], packed["wkv0"], packed["wq1"], packed["wkv1"],
                packed["wo"], packed["b0"], packed["b1"])
    in_specs = ([batched(a) for a in operands[:4]]
                + [resident(a) for a in operands[4:]])

    return pl.pallas_call(
        _make_imab_kernel(num_heads, dim_out),
        out_shape=jax.ShapeDtypeStruct((B, Nx, dim_out), X.dtype),
        grid=grid,
        in_specs=in_specs,
        out_specs=pl.BlockSpec((block_b, Nx, dim_out), lambda g: (g, 0, 0)),
        scratch_shapes=[
            pltpu.VMEM((block_b, num_inds, dim_out), jnp.float32),  # mab0 head slab
            pltpu.VMEM((block_b, Nx, dim_out), jnp.float32),        # mab1 head slab
        ],
        compiler_params=pltpu.CompilerParams(
            dimension_semantics=("parallel",),
            vmem_limit_bytes=32 * 1024 * 1024),
    )(*operands)


# ----------------------------------------------------------------------------
# Pure-JAX reference (mirrors the PyTorch code literally) for self-check
# ----------------------------------------------------------------------------
def _mab_ref(Q, K, mask, p, num_heads, dim_V):
    Qp = Q @ p["wq"].T + p["bq"]
    Kp = K @ p["wk"].T + p["bk"]
    Vp = K @ p["wv"].T + p["bv"]
    Q_ = jnp.concatenate(jnp.split(Qp, num_heads, axis=2), axis=0)
    K_ = jnp.concatenate(jnp.split(Kp, num_heads, axis=2), axis=0)
    V_ = jnp.concatenate(jnp.split(Vp, num_heads, axis=2), axis=0)
    att = Q_ @ K_.transpose(0, 2, 1) / math.sqrt(dim_V)
    mask_full = jnp.tile(mask, (num_heads, 1, 1))
    att = jnp.where(mask_full == 0, -1e10, att)
    A = jax.nn.softmax(att, axis=2)
    O = Q_ + A @ V_
    O = jnp.concatenate(jnp.split(O, num_heads, axis=0), axis=2)
    return O + jax.nn.relu(O @ p["wo"].T + p["bo"])


def _imab_ref(X, Y, mask1, mask2, params, num_heads, num_inds, dim_out):
    B, Nx, _ = X.shape
    Ny = Y.shape[1]
    mask_r = jnp.broadcast_to(mask1[:, None, :], (B, num_inds, Ny))
    I_rep = jnp.broadcast_to(params["I"], (B, num_inds, dim_out))
    H = _mab_ref(I_rep, Y, mask_r, params["mab0"], num_heads, dim_out)
    mask_o = jnp.broadcast_to(mask2[:, :, None], (B, Nx, num_inds))
    return _mab_ref(X, H, mask_o, params["mab1"], num_heads, dim_out)


# ----------------------------------------------------------------------------
# Deterministic parameter init (PyTorch default Linear init + xavier for I)
# ----------------------------------------------------------------------------
def _init_linear(key, d_in, d_out):
    k1, k2 = jax.random.split(key)
    bound = 1.0 / math.sqrt(d_in)
    w = jax.random.uniform(k1, (d_out, d_in), jnp.float32, -bound, bound)
    b = jax.random.uniform(k2, (d_out,), jnp.float32, -bound, bound)
    return w, b


def _init_mab(key, dim_Q, dim_K, dim_V):
    ks = jax.random.split(key, 4)
    wq, bq = _init_linear(ks[0], dim_Q, dim_V)
    wk, bk = _init_linear(ks[1], dim_K, dim_V)
    wv, bv = _init_linear(ks[2], dim_K, dim_V)
    wo, bo = _init_linear(ks[3], dim_V, dim_V)
    return dict(wq=wq, bq=bq, wk=wk, bk=bk, wv=wv, bv=bv, wo=wo, bo=bo)


def init_imab_params(key, dim_in, dim_out, num_inds):
    k_i, k0, k1 = jax.random.split(key, 3)
    fan_in, fan_out = num_inds * dim_out, dim_out
    bound = math.sqrt(6.0 / (fan_in + fan_out))
    I = jax.random.uniform(k_i, (1, num_inds, dim_out), jnp.float32, -bound, bound)
    return dict(
        I=I,
        mab0=_init_mab(k0, dim_out, dim_in, dim_out),
        mab1=_init_mab(k1, dim_in, dim_out, dim_out),
    )


# ----------------------------------------------------------------------------
# Main
# ----------------------------------------------------------------------------
if __name__ == "__main__":
    # TODO(synk): ln=True branch (LayerNorm) not implemented; module default ln=False.
    dim_in, dim_out, num_heads, num_inds = 16, 32, 4, 8
    B, Nx, Ny = 2, 12, 10

    key = jax.random.PRNGKey(0)
    kp, kx, ky = jax.random.split(key, 3)
    params = init_imab_params(kp, dim_in, dim_out, num_inds)
    packed = pack_imab_params(params, dim_out)

    X = jax.random.normal(kx, (B, Nx, dim_in), jnp.float32)
    Y = jax.random.normal(ky, (B, Ny, dim_in), jnp.float32)

    # binary masks (1 = keep, 0 = masked)
    mask1 = jnp.ones((B, Ny), jnp.float32).at[0, -3:].set(0.0).at[1, -1:].set(0.0)
    mask2 = jnp.ones((B, Nx), jnp.float32).at[0, -2:].set(0.0).at[1, -4:].set(0.0)

    fwd = jax.jit(functools.partial(
        imab_forward, num_heads=num_heads, num_inds=num_inds, dim_out=dim_out))
    out = jax.block_until_ready(fwd(X, Y, mask1, mask2, packed))

    ref = _imab_ref(X, Y, mask1, mask2, params, num_heads, num_inds, dim_out)
    assert out.shape == (B, Nx, dim_out)
    # bf16 MXU operands + approx reciprocal -> validate at bf16-level tolerance
    # against the f32 reference (elementwise/softmax math in the kernel is f32).
    assert jnp.allclose(out, ref, rtol=5e-2, atol=5e-2), "mismatch vs JAX reference"

    print("KERNEL_OK")
</pallas_src>

<mosaic_0001>
module attributes {stable_mosaic.version = 11 : i64} {
  func.func @kernel(%arg0: i32, %arg1: memref<1x12x16xf32, #tpu.memory_space<vmem>>, %arg2: memref<1x10x16xf32, #tpu.memory_space<vmem>>, %arg3: memref<1x1x10xf32, #tpu.memory_space<vmem>>, %arg4: memref<1x12x1xf32, #tpu.memory_space<vmem>>, %arg5: memref<8x32xf32, #tpu.memory_space<vmem>>, %arg6: memref<16x64xbf16, #tpu.memory_space<vmem>>, %arg7: memref<16x32xbf16, #tpu.memory_space<vmem>>, %arg8: memref<32x64xbf16, #tpu.memory_space<vmem>>, %arg9: memref<2x32x32xbf16, #tpu.memory_space<vmem>>, %arg10: memref<1x96xf32, #tpu.memory_space<vmem>>, %arg11: memref<1x128xf32, #tpu.memory_space<vmem>>, %arg12: memref<1x12x32xf32, #tpu.memory_space<vmem>>, %arg13: memref<1x8x32xf32, #tpu.memory_space<vmem>>, %arg14: memref<1x12x32xf32, #tpu.memory_space<vmem>>) attributes {dimension_semantics = [#tpu.dimension_semantics<parallel>], iteration_bounds = array<i64: 2>, scalar_prefetch = 0 : i64, scratch_operands = 2 : i64, tpu.core_type = #tpu.core_type<tc>, window_params = [{transform_indices = @transform_0, window_bounds = array<i64: 1, 12, 16>}, {transform_indices = @transform_1, window_bounds = array<i64: 1, 10, 16>}, {transform_indices = @transform_2, window_bounds = array<i64: 1, 1, 10>}, {transform_indices = @transform_3, window_bounds = array<i64: 1, 12, 1>}, {pipeline_mode = #tpu.pipeline_mode<synchronous>, transform_indices = @transform_4, window_bounds = array<i64: 8, 32>}, {pipeline_mode = #tpu.pipeline_mode<synchronous>, transform_indices = @transform_5, window_bounds = array<i64: 16, 64>}, {pipeline_mode = #tpu.pipeline_mode<synchronous>, transform_indices = @transform_6, window_bounds = array<i64: 16, 32>}, {pipeline_mode = #tpu.pipeline_mode<synchronous>, transform_indices = @transform_7, window_bounds = array<i64: 32, 64>}, {pipeline_mode = #tpu.pipeline_mode<synchronous>, transform_indices = @transform_8, window_bounds = array<i64: 2, 32, 32>}, {pipeline_mode = #tpu.pipeline_mode<synchronous>, transform_indices = @transform_9, window_bounds = array<i64: 1, 96>}, {pipeline_mode = #tpu.pipeline_mode<synchronous>, transform_indices = @transform_10, window_bounds = array<i64: 1, 128>}, {transform_indices = @transform_11, window_bounds = array<i64: 1, 12, 32>}]} {
    %c0 = arith.constant 0 : index
    %c0_0 = arith.constant 0 : index
    %0 = vector.load %arg10[%c0, %c0_0] : memref<1x96xf32, #tpu.memory_space<vmem>>, vector<1x64xf32>
    %c0_1 = arith.constant 0 : index
    %c64 = arith.constant 64 : index
    %1 = vector.load %arg10[%c0_1, %c64] : memref<1x96xf32, #tpu.memory_space<vmem>>, vector<1x32xf32>
    %c0_2 = arith.constant 0 : index
    %c0_3 = arith.constant 0 : index
    %2 = vector.load %arg11[%c0_2, %c0_3] : memref<1x128xf32, #tpu.memory_space<vmem>>, vector<1x32xf32>
    %c0_4 = arith.constant 0 : index
    %c32 = arith.constant 32 : index
    %3 = vector.load %arg11[%c0_4, %c32] : memref<1x128xf32, #tpu.memory_space<vmem>>, vector<1x64xf32>
    %c0_5 = arith.constant 0 : index
    %c96 = arith.constant 96 : index
    %4 = vector.load %arg11[%c0_5, %c96] : memref<1x128xf32, #tpu.memory_space<vmem>>, vector<1x32xf32>
    %c0_6 = arith.constant 0 : index
    %c0_7 = arith.constant 0 : index
    %5 = vector.load %arg5[%c0_6, %c0_7] : memref<8x32xf32, #tpu.memory_space<vmem>>, vector<8x32xf32>
    %6 = vector.shape_cast %5 : vector<8x32xf32> to vector<1x8x32xf32>
    %c0_8 = arith.constant 0 : index
    %c0_9 = arith.constant 0 : index
    %c0_10 = arith.constant 0 : index
    %7 = vector.load %arg3[%c0_8, %c0_9, %c0_10] : memref<1x1x10xf32, #tpu.memory_space<vmem>>, vector<1x1x10xf32>
    %8 = vector.shape_cast %7 : vector<1x1x10xf32> to vector<1x1x10xf32>
    %9 = vector.broadcast %8 : vector<1x1x10xf32> to vector<1x8x10xf32>
    %cst = arith.constant 0.000000e+00 : f32
    %10 = vector.broadcast %cst : f32 to vector<1x8x10xf32>
    %11 = arith.cmpf oeq, %9, %10 : vector<1x8x10xf32>
    %c0_11 = arith.constant 0 : index
    %c0_12 = arith.constant 0 : index
    %c0_13 = arith.constant 0 : index
    %12 = vector.load %arg2[%c0_11, %c0_12, %c0_13] : memref<1x10x16xf32, #tpu.memory_space<vmem>>, vector<1x10x16xf32>
    %c0_14 = arith.constant 0 : index
    %c0_15 = arith.constant 0 : index
    %13 = vector.load %arg6[%c0_14, %c0_15] : memref<16x64xbf16, #tpu.memory_space<vmem>>, vector<16x64xbf16>
    %c0_16 = arith.constant 0 : index
    %c0_17 = arith.constant 0 : index
    %c0_18 = arith.constant 0 : index
    %14 = vector.load %arg9[%c0_16, %c0_17, %c0_18] : memref<2x32x32xbf16, #tpu.memory_space<vmem>>, vector<1x32x32xbf16>
    %15 = vector.shape_cast %14 : vector<1x32x32xbf16> to vector<32x32xbf16>
    %16 = vector.shape_cast %12 : vector<1x10x16xf32> to vector<10x16xf32>
    %17 = arith.truncf %16 : vector<10x16xf32> to vector<10x16xbf16>
    %cst_19 = arith.constant dense<0.000000e+00> : vector<10x64xf32>
    %18 = tpu.matmul %17, %13, %cst_19 {dimension_numbers = #tpu.dot_dimension_numbers<[1], [0], [0], [1], [0, 0, 1, 1], [], []>} : vector<10x16xbf16>, vector<16x64xbf16>, vector<10x64xf32> -> vector<10x64xf32>
    %19 = vector.broadcast %0 : vector<1x64xf32> to vector<10x64xf32>
    %20 = arith.addf %18, %19 : vector<10x64xf32>
    %21 = vector.shape_cast %20 : vector<10x64xf32> to vector<1x10x64xf32>
    %22 = vector.extract_strided_slice %21 {offsets = [0, 0, 0], sizes = [1, 10, 32], strides = [1, 1, 1]} : vector<1x10x64xf32> to vector<1x10x32xf32>
    %23 = arith.truncf %22 : vector<1x10x32xf32> to vector<1x10x32xbf16>
    %24 = vector.extract_strided_slice %21 {offsets = [0, 0, 32], sizes = [1, 10, 32], strides = [1, 1, 1]} : vector<1x10x64xf32> to vector<1x10x32xf32>
    %25 = arith.truncf %24 : vector<1x10x32xf32> to vector<1x10x32xbf16>
    %26 = arith.truncf %6 : vector<1x8x32xf32> to vector<1x8x32xbf16>
    %27 = vector.extract_strided_slice %26 {offsets = [0, 0, 0], sizes = [1, 8, 8], strides = [1, 1, 1]} : vector<1x8x32xbf16> to vector<1x8x8xbf16>
    %28 = vector.extract_strided_slice %23 {offsets = [0, 0, 0], sizes = [1, 10, 8], strides = [1, 1, 1]} : vector<1x10x32xbf16> to vector<1x10x8xbf16>
    "tpu.trace_start"() <{level = 10 : i32, message = "bqd,bkd->bqk"}> : () -> ()
    %cst_20 = arith.constant dense<0.000000e+00> : vector<1x8x10xf32>
    %29 = tpu.matmul %27, %28, %cst_20 {dimension_numbers = #tpu.dot_dimension_numbers<[2], [2], [1], [1], [0, 0, 0, 1, 1, 1], [0], [0]>} : vector<1x8x8xbf16>, vector<1x10x8xbf16>, vector<1x8x10xf32> -> vector<1x8x10xf32>
    %cst_21 = arith.constant -1.000000e+10 : f32
    "tpu.trace_stop"() : () -> ()
    %30 = vector.broadcast %cst_21 : f32 to vector<1x8x10xf32>
    %31 = arith.select %11, %30, %29 : vector<1x8x10xi1>, vector<1x8x10xf32>
    %cst_22 = arith.constant dense<0xFF800000> : vector<1x8xf32>
    %32 = vector.multi_reduction <maximumf>, %31, %cst_22 [2] : vector<1x8x10xf32> to vector<1x8xf32>
    %33 = vector.shape_cast %32 : vector<1x8xf32> to vector<1x8x1xf32>
    %34 = vector.broadcast %33 : vector<1x8x1xf32> to vector<1x8x10xf32>
    %35 = arith.subf %31, %34 : vector<1x8x10xf32>
    %36 = math.exp %35 : vector<1x8x10xf32>
    %cst_23 = arith.constant dense<0.000000e+00> : vector<1x8xf32>
    %37 = vector.multi_reduction <add>, %36, %cst_23 [2] : vector<1x8x10xf32> to vector<1x8xf32>
    %38 = vector.shape_cast %37 : vector<1x8xf32> to vector<1x8x1xf32>
    %39 = tpu.reciprocal %38 {approx = true} : vector<1x8x1xf32> -> vector<1x8x1xf32>
    %40 = vector.broadcast %39 : vector<1x8x1xf32> to vector<1x8x10xf32>
    %41 = arith.mulf %36, %40 : vector<1x8x10xf32>
    %42 = arith.truncf %41 : vector<1x8x10xf32> to vector<1x8x10xbf16>
    %43 = vector.extract_strided_slice %25 {offsets = [0, 0, 0], sizes = [1, 10, 8], strides = [1, 1, 1]} : vector<1x10x32xbf16> to vector<1x10x8xbf16>
    "tpu.trace_start"() <{level = 10 : i32, message = "bqk,bkd->bqd"}> : () -> ()
    %cst_24 = arith.constant dense<0.000000e+00> : vector<1x8x8xf32>
    %44 = tpu.matmul %42, %43, %cst_24 {dimension_numbers = #tpu.dot_dimension_numbers<[2], [1], [1], [2], [0, 0, 0, 1, 1, 2], [0], [0]>} : vector<1x8x10xbf16>, vector<1x10x8xbf16>, vector<1x8x8xf32> -> vector<1x8x8xf32>
    "tpu.trace_stop"() : () -> ()
    %c0_25 = arith.constant 0 : index
    %c0_26 = arith.constant 0 : index
    %c0_27 = arith.constant 0 : index
    %45 = vector.load %arg13[%c0_25, %c0_26, %c0_27] : memref<1x8x32xf32, #tpu.memory_space<vmem>>, vector<1x8x8xf32>
    tpu.vector_store %arg13[%c0_25, %c0_26, %c0_27], %44 {strides = array<i32>} : memref<1x8x32xf32, #tpu.memory_space<vmem>>, vector<1x8x8xf32>,
    %46 = vector.extract_strided_slice %26 {offsets = [0, 0, 8], sizes = [1, 8, 8], strides = [1, 1, 1]} : vector<1x8x32xbf16> to vector<1x8x8xbf16>
    %47 = vector.extract_strided_slice %23 {offsets = [0, 0, 8], sizes = [1, 10, 8], strides = [1, 1, 1]} : vector<1x10x32xbf16> to vector<1x10x8xbf16>
    "tpu.trace_start"() <{level = 10 : i32, message = "bqd,bkd->bqk"}> : () -> ()
    %cst_28 = arith.constant dense<0.000000e+00> : vector<1x8x10xf32>
    %48 = tpu.matmul %46, %47, %cst_28 {dimension_numbers = #tpu.dot_dimension_numbers<[2], [2], [1], [1], [0, 0, 0, 1, 1, 1], [0], [0]>} : vector<1x8x8xbf16>, vector<1x10x8xbf16>, vector<1x8x10xf32> -> vector<1x8x10xf32>
    %cst_29 = arith.constant -1.000000e+10 : f32
    "tpu.trace_stop"() : () -> ()
    %49 = vector.broadcast %cst_29 : f32 to vector<1x8x10xf32>
    %50 = arith.select %11, %49, %48 : vector<1x8x10xi1>, vector<1x8x10xf32>
    %cst_30 = arith.constant dense<0xFF800000> : vector<1x8xf32>
    %51 = vector.multi_reduction <maximumf>, %50, %cst_30 [2] : vector<1x8x10xf32> to vector<1x8xf32>
    %52 = vector.shape_cast %51 : vector<1x8xf32> to vector<1x8x1xf32>
    %53 = vector.broadcast %52 : vector<1x8x1xf32> to vector<1x8x10xf32>
    %54 = arith.subf %50, %53 : vector<1x8x10xf32>
    %55 = math.exp %54 : vector<1x8x10xf32>
    %cst_31 = arith.constant dense<0.000000e+00> : vector<1x8xf32>
    %56 = vector.multi_reduction <add>, %55, %cst_31 [2] : vector<1x8x10xf32> to vector<1x8xf32>
    %57 = vector.shape_cast %56 : vector<1x8xf32> to vector<1x8x1xf32>
    %58 = tpu.reciprocal %57 {approx = true} : vector<1x8x1xf32> -> vector<1x8x1xf32>
    %59 = vector.broadcast %58 : vector<1x8x1xf32> to vector<1x8x10xf32>
    %60 = arith.mulf %55, %59 : vector<1x8x10xf32>
    %61 = arith.truncf %60 : vector<1x8x10xf32> to vector<1x8x10xbf16>
    %62 = vector.extract_strided_slice %25 {offsets = [0, 0, 8], sizes = [1, 10, 8], strides = [1, 1, 1]} : vector<1x10x32xbf16> to vector<1x10x8xbf16>
    "tpu.trace_start"() <{level = 10 : i32, message = "bqk,bkd->bqd"}> : () -> ()
    %cst_32 = arith.constant dense<0.000000e+00> : vector<1x8x8xf32>
    %63 = tpu.matmul %61, %62, %cst_32 {dimension_numbers = #tpu.dot_dimension_numbers<[2], [1], [1], [2], [0, 0, 0, 1, 1, 2], [0], [0]>} : vector<1x8x10xbf16>, vector<1x10x8xbf16>, vector<1x8x8xf32> -> vector<1x8x8xf32>
    "tpu.trace_stop"() : () -> ()
    %c0_33 = arith.constant 0 : index
    %c0_34 = arith.constant 0 : index
    %c8 = arith.constant 8 : index
    %64 = vector.load %arg13[%c0_33, %c0_34, %c8] : memref<1x8x32xf32, #tpu.memory_space<vmem>>, vector<1x8x8xf32>
    tpu.vector_store %arg13[%c0_33, %c0_34, %c8], %63 {strides = array<i32>} : memref<1x8x32xf32, #tpu.memory_space<vmem>>, vector<1x8x8xf32>,
    %65 = vector.extract_strided_slice %26 {offsets = [0, 0, 16], sizes = [1, 8, 8], strides = [1, 1, 1]} : vector<1x8x32xbf16> to vector<1x8x8xbf16>
    %66 = vector.extract_strided_slice %23 {offsets = [0, 0, 16], sizes = [1, 10, 8], strides = [1, 1, 1]} : vector<1x10x32xbf16> to vector<1x10x8xbf16>
    "tpu.trace_start"() <{level = 10 : i32, message = "bqd,bkd->bqk"}> : () -> ()
    %cst_35 = arith.constant dense<0.000000e+00> : vector<1x8x10xf32>
    %67 = tpu.matmul %65, %66, %cst_35 {dimension_numbers = #tpu.dot_dimension_numbers<[2], [2], [1], [1], [0, 0, 0, 1, 1, 1], [0], [0]>} : vector<1x8x8xbf16>, vector<1x10x8xbf16>, vector<1x8x10xf32> -> vector<1x8x10xf32>
    %cst_36 = arith.constant -1.000000e+10 : f32
    "tpu.trace_stop"() : () -> ()
    %68 = vector.broadcast %cst_36 : f32 to vector<1x8x10xf32>
    %69 = arith.select %11, %68, %67 : vector<1x8x10xi1>, vector<1x8x10xf32>
    %cst_37 = arith.constant dense<0xFF800000> : vector<1x8xf32>
    %70 = vector.multi_reduction <maximumf>, %69, %cst_37 [2] : vector<1x8x10xf32> to vector<1x8xf32>
    %71 = vector.shape_cast %70 : vector<1x8xf32> to vector<1x8x1xf32>
    %72 = vector.broadcast %71 : vector<1x8x1xf32> to vector<1x8x10xf32>
    %73 = arith.subf %69, %72 : vector<1x8x10xf32>
    %74 = math.exp %73 : vector<1x8x10xf32>
    %cst_38 = arith.constant dense<0.000000e+00> : vector<1x8xf32>
    %75 = vector.multi_reduction <add>, %74, %cst_38 [2] : vector<1x8x10xf32> to vector<1x8xf32>
    %76 = vector.shape_cast %75 : vector<1x8xf32> to vector<1x8x1xf32>
    %77 = tpu.reciprocal %76 {approx = true} : vector<1x8x1xf32> -> vector<1x8x1xf32>
    %78 = vector.broadcast %77 : vector<1x8x1xf32> to vector<1x8x10xf32>
    %79 = arith.mulf %74, %78 : vector<1x8x10xf32>
    %80 = arith.truncf %79 : vector<1x8x10xf32> to vector<1x8x10xbf16>
    %81 = vector.extract_strided_slice %25 {offsets = [0, 0, 16], sizes = [1, 10, 8], strides = [1, 1, 1]} : vector<1x10x32xbf16> to vector<1x10x8xbf16>
    "tpu.trace_start"() <{level = 10 : i32, message = "bqk,bkd->bqd"}> : () -> ()
    %cst_39 = arith.constant dense<0.000000e+00> : vector<1x8x8xf32>
    %82 = tpu.matmul %80, %81, %cst_39 {dimension_numbers = #tpu.dot_dimension_numbers<[2], [1], [1], [2], [0, 0, 0, 1, 1, 2], [0], [0]>} : vector<1x8x10xbf16>, vector<1x10x8xbf16>, vector<1x8x8xf32> -> vector<1x8x8xf32>
    "tpu.trace_stop"() : () -> ()
    %c0_40 = arith.constant 0 : index
    %c0_41 = arith.constant 0 : index
    %c16 = arith.constant 16 : index
    %83 = vector.load %arg13[%c0_40, %c0_41, %c16] : memref<1x8x32xf32, #tpu.memory_space<vmem>>, vector<1x8x8xf32>
    tpu.vector_store %arg13[%c0_40, %c0_41, %c16], %82 {strides = array<i32>} : memref<1x8x32xf32, #tpu.memory_space<vmem>>, vector<1x8x8xf32>,
    %84 = vector.extract_strided_slice %26 {offsets = [0, 0, 24], sizes = [1, 8, 8], strides = [1, 1, 1]} : vector<1x8x32xbf16> to vector<1x8x8xbf16>
    %85 = vector.extract_strided_slice %23 {offsets = [0, 0, 24], sizes = [1, 10, 8], strides = [1, 1, 1]} : vector<1x10x32xbf16> to vector<1x10x8xbf16>
    "tpu.trace_start"() <{level = 10 : i32, message = "bqd,bkd->bqk"}> : () -> ()
    %cst_42 = arith.constant dense<0.000000e+00> : vector<1x8x10xf32>
    %86 = tpu.matmul %84, %85, %cst_42 {dimension_numbers = #tpu.dot_dimension_numbers<[2], [2], [1], [1], [0, 0, 0, 1, 1, 1], [0], [0]>} : vector<1x8x8xbf16>, vector<1x10x8xbf16>, vector<1x8x10xf32> -> vector<1x8x10xf32>
    %cst_43 = arith.constant -1.000000e+10 : f32
    "tpu.trace_stop"() : () -> ()
    %87 = vector.broadcast %cst_43 : f32 to vector<1x8x10xf32>
    %88 = arith.select %11, %87, %86 : vector<1x8x10xi1>, vector<1x8x10xf32>
    %cst_44 = arith.constant dense<0xFF800000> : vector<1x8xf32>
    %89 = vector.multi_reduction <maximumf>, %88, %cst_44 [2] : vector<1x8x10xf32> to vector<1x8xf32>
    %90 = vector.shape_cast %89 : vector<1x8xf32> to vector<1x8x1xf32>
    %91 = vector.broadcast %90 : vector<1x8x1xf32> to vector<1x8x10xf32>
    %92 = arith.subf %88, %91 : vector<1x8x10xf32>
    %93 = math.exp %92 : vector<1x8x10xf32>
    %cst_45 = arith.constant dense<0.000000e+00> : vector<1x8xf32>
    %94 = vector.multi_reduction <add>, %93, %cst_45 [2] : vector<1x8x10xf32> to vector<1x8xf32>
    %95 = vector.shape_cast %94 : vector<1x8xf32> to vector<1x8x1xf32>
    %96 = tpu.reciprocal %95 {approx = true} : vector<1x8x1xf32> -> vector<1x8x1xf32>
    %97 = vector.broadcast %96 : vector<1x8x1xf32> to vector<1x8x10xf32>
    %98 = arith.mulf %93, %97 : vector<1x8x10xf32>
    %99 = arith.truncf %98 : vector<1x8x10xf32> to vector<1x8x10xbf16>
    %100 = vector.extract_strided_slice %25 {offsets = [0, 0, 24], sizes = [1, 10, 8], strides = [1, 1, 1]} : vector<1x10x32xbf16> to vector<1x10x8xbf16>
    "tpu.trace_start"() <{level = 10 : i32, message = "bqk,bkd->bqd"}> : () -> ()
    %cst_46 = arith.constant dense<0.000000e+00> : vector<1x8x8xf32>
    %101 = tpu.matmul %99, %100, %cst_46 {dimension_numbers = #tpu.dot_dimension_numbers<[2], [1], [1], [2], [0, 0, 0, 1, 1, 2], [0], [0]>} : vector<1x8x10xbf16>, vector<1x10x8xbf16>, vector<1x8x8xf32> -> vector<1x8x8xf32>
    "tpu.trace_stop"() : () -> ()
    %c0_47 = arith.constant 0 : index
    %c0_48 = arith.constant 0 : index
    %c24 = arith.constant 24 : index
    %102 = vector.load %arg13[%c0_47, %c0_48, %c24] : memref<1x8x32xf32, #tpu.memory_space<vmem>>, vector<1x8x8xf32>
    tpu.vector_store %arg13[%c0_47, %c0_48, %c24], %101 {strides = array<i32>} : memref<1x8x32xf32, #tpu.memory_space<vmem>>, vector<1x8x8xf32>,
    %c0_49 = arith.constant 0 : index
    %c0_50 = arith.constant 0 : index
    %c0_51 = arith.constant 0 : index
    %103 = vector.load %arg13[%c0_49, %c0_50, %c0_51] : memref<1x8x32xf32, #tpu.memory_space<vmem>>, vector<1x8x32xf32>
    %104 = arith.addf %6, %103 : vector<1x8x32xf32>
    %105 = vector.shape_cast %104 : vector<1x8x32xf32> to vector<8x32xf32>
    %106 = arith.truncf %105 : vector<8x32xf32> to vector<8x32xbf16>
    %cst_52 = arith.constant dense<0.000000e+00> : vector<8x32xf32>
    %107 = tpu.matmul %106, %15, %cst_52 {dimension_numbers = #tpu.dot_dimension_numbers<[1], [0], [0], [1], [0, 0, 1, 1], [], []>} : vector<8x32xbf16>, vector<32x32xbf16>, vector<8x32xf32> -> vector<8x32xf32>
    %108 = vector.broadcast %1 : vector<1x32xf32> to vector<8x32xf32>
    %109 = arith.addf %107, %108 : vector<8x32xf32>
    %cst_53 = arith.constant 0.000000e+00 : f32
    %110 = vector.broadcast %cst_53 : f32 to vector<8x32xf32>
    %111 = arith.maximumf %109, %110 : vector<8x32xf32>
    %112 = vector.shape_cast %111 : vector<8x32xf32> to vector<1x8x32xf32>
    %113 = arith.addf %104, %112 : vector<1x8x32xf32>
    %c0_54 = arith.constant 0 : index
    %c0_55 = arith.constant 0 : index
    %c0_56 = arith.constant 0 : index
    %114 = vector.load %arg1[%c0_54, %c0_55, %c0_56] : memref<1x12x16xf32, #tpu.memory_space<vmem>>, vector<1x12x16xf32>
    %115 = vector.shape_cast %114 : vector<1x12x16xf32> to vector<12x16xf32>
    %116 = arith.truncf %115 : vector<12x16xf32> to vector<12x16xbf16>
    %c0_57 = arith.constant 0 : index
    %c0_58 = arith.constant 0 : index
    %117 = vector.load %arg7[%c0_57, %c0_58] : memref<16x32xbf16, #tpu.memory_space<vmem>>, vector<16x32xbf16>
    %cst_59 = arith.constant dense<0.000000e+00> : vector<12x32xf32>
    %118 = tpu.matmul %116, %117, %cst_59 {dimension_numbers = #tpu.dot_dimension_numbers<[1], [0], [0], [1], [0, 0, 1, 1], [], []>} : vector<12x16xbf16>, vector<16x32xbf16>, vector<12x32xf32> -> vector<12x32xf32>
    %119 = vector.broadcast %2 : vector<1x32xf32> to vector<12x32xf32>
    %120 = arith.addf %118, %119 : vector<12x32xf32>
    %121 = vector.shape_cast %120 : vector<12x32xf32> to vector<1x12x32xf32>
    %c0_60 = arith.constant 0 : index
    %c0_61 = arith.constant 0 : index
    %c0_62 = arith.constant 0 : index
    %122 = vector.load %arg4[%c0_60, %c0_61, %c0_62] : memref<1x12x1xf32, #tpu.memory_space<vmem>>, vector<1x12x1xf32>
    %123 = vector.shape_cast %122 : vector<1x12x1xf32> to vector<1x12x1xf32>
    %124 = vector.broadcast %123 : vector<1x12x1xf32> to vector<1x12x8xf32>
    %cst_63 = arith.constant 0.000000e+00 : f32
    %125 = vector.broadcast %cst_63 : f32 to vector<1x12x8xf32>
    %126 = arith.cmpf oeq, %124, %125 : vector<1x12x8xf32>
    %c0_64 = arith.constant 0 : index
    %c0_65 = arith.constant 0 : index
    %127 = vector.load %arg8[%c0_64, %c0_65] : memref<32x64xbf16, #tpu.memory_space<vmem>>, vector<32x64xbf16>
    %c1 = arith.constant 1 : index
    %c0_66 = arith.constant 0 : index
    %c0_67 = arith.constant 0 : index
    %128 = vector.load %arg9[%c1, %c0_66, %c0_67] : memref<2x32x32xbf16, #tpu.memory_space<vmem>>, vector<1x32x32xbf16>
    %129 = vector.shape_cast %128 : vector<1x32x32xbf16> to vector<32x32xbf16>
    %130 = vector.shape_cast %113 : vector<1x8x32xf32> to vector<8x32xf32>
    %131 = arith.truncf %130 : vector<8x32xf32> to vector<8x32xbf16>
    %cst_68 = arith.constant dense<0.000000e+00> : vector<8x64xf32>
    %132 = tpu.matmul %131, %127, %cst_68 {dimension_numbers = #tpu.dot_dimension_numbers<[1], [0], [0], [1], [0, 0, 1, 1], [], []>} : vector<8x32xbf16>, vector<32x64xbf16>, vector<8x64xf32> -> vector<8x64xf32>
    %133 = vector.broadcast %3 : vector<1x64xf32> to vector<8x64xf32>
    %134 = arith.addf %132, %133 : vector<8x64xf32>
    %135 = vector.shape_cast %134 : vector<8x64xf32> to vector<1x8x64xf32>
    %136 = vector.extract_strided_slice %135 {offsets = [0, 0, 0], sizes = [1, 8, 32], strides = [1, 1, 1]} : vector<1x8x64xf32> to vector<1x8x32xf32>
    %137 = arith.truncf %136 : vector<1x8x32xf32> to vector<1x8x32xbf16>
    %138 = vector.extract_strided_slice %135 {offsets = [0, 0, 32], sizes = [1, 8, 32], strides = [1, 1, 1]} : vector<1x8x64xf32> to vector<1x8x32xf32>
    %139 = arith.truncf %138 : vector<1x8x32xf32> to vector<1x8x32xbf16>
    %140 = arith.truncf %121 : vector<1x12x32xf32> to vector<1x12x32xbf16>
    %141 = vector.extract_strided_slice %140 {offsets = [0, 0, 0], sizes = [1, 12, 8], strides = [1, 1, 1]} : vector<1x12x32xbf16> to vector<1x12x8xbf16>
    %142 = vector.extract_strided_slice %137 {offsets = [0, 0, 0], sizes = [1, 8, 8], strides = [1, 1, 1]} : vector<1x8x32xbf16> to vector<1x8x8xbf16>
    "tpu.trace_start"() <{level = 10 : i32, message = "bqd,bkd->bqk"}> : () -> ()
    %cst_69 = arith.constant dense<0.000000e+00> : vector<1x12x8xf32>
    %143 = tpu.matmul %141, %142, %cst_69 {dimension_numbers = #tpu.dot_dimension_numbers<[2], [2], [1], [1], [0, 0, 0, 1, 1, 1], [0], [0]>} : vector<1x12x8xbf16>, vector<1x8x8xbf16>, vector<1x12x8xf32> -> vector<1x12x8xf32>
    %cst_70 = arith.constant -1.000000e+10 : f32
    "tpu.trace_stop"() : () -> ()
    %144 = vector.broadcast %cst_70 : f32 to vector<1x12x8xf32>
    %145 = arith.select %126, %144, %143 : vector<1x12x8xi1>, vector<1x12x8xf32>
    %cst_71 = arith.constant dense<0xFF800000> : vector<1x12xf32>
    %146 = vector.multi_reduction <maximumf>, %145, %cst_71 [2] : vector<1x12x8xf32> to vector<1x12xf32>
    %147 = vector.shape_cast %146 : vector<1x12xf32> to vector<1x12x1xf32>
    %148 = vector.broadcast %147 : vector<1x12x1xf32> to vector<1x12x8xf32>
    %149 = arith.subf %145, %148 : vector<1x12x8xf32>
    %150 = math.exp %149 : vector<1x12x8xf32>
    %cst_72 = arith.constant dense<0.000000e+00> : vector<1x12xf32>
    %151 = vector.multi_reduction <add>, %150, %cst_72 [2] : vector<1x12x8xf32> to vector<1x12xf32>
    %152 = vector.shape_cast %151 : vector<1x12xf32> to vector<1x12x1xf32>
    %153 = tpu.reciprocal %152 {approx = true} : vector<1x12x1xf32> -> vector<1x12x1xf32>
    %154 = vector.broadcast %153 : vector<1x12x1xf32> to vector<1x12x8xf32>
    %155 = arith.mulf %150, %154 : vector<1x12x8xf32>
    %156 = arith.truncf %155 : vector<1x12x8xf32> to vector<1x12x8xbf16>
    %157 = vector.extract_strided_slice %139 {offsets = [0, 0, 0], sizes = [1, 8, 8], strides = [1, 1, 1]} : vector<1x8x32xbf16> to vector<1x8x8xbf16>
    "tpu.trace_start"() <{level = 10 : i32, message = "bqk,bkd->bqd"}> : () -> ()
    %cst_73 = arith.constant dense<0.000000e+00> : vector<1x12x8xf32>
    %158 = tpu.matmul %156, %157, %cst_73 {dimension_numbers = #tpu.dot_dimension_numbers<[2], [1], [1], [2], [0, 0, 0, 1, 1, 2], [0], [0]>} : vector<1x12x8xbf16>, vector<1x8x8xbf16>, vector<1x12x8xf32> -> vector<1x12x8xf32>
    "tpu.trace_stop"() : () -> ()
    %c0_74 = arith.constant 0 : index
    %c0_75 = arith.constant 0 : index
    %c0_76 = arith.constant 0 : index
    %159 = vector.load %arg14[%c0_74, %c0_75, %c0_76] : memref<1x12x32xf32, #tpu.memory_space<vmem>>, vector<1x12x8xf32>
    tpu.vector_store %arg14[%c0_74, %c0_75, %c0_76], %158 {strides = array<i32>} : memref<1x12x32xf32, #tpu.memory_space<vmem>>, vector<1x12x8xf32>,
    %160 = vector.extract_strided_slice %140 {offsets = [0, 0, 8], sizes = [1, 12, 8], strides = [1, 1, 1]} : vector<1x12x32xbf16> to vector<1x12x8xbf16>
    %161 = vector.extract_strided_slice %137 {offsets = [0, 0, 8], sizes = [1, 8, 8], strides = [1, 1, 1]} : vector<1x8x32xbf16> to vector<1x8x8xbf16>
    "tpu.trace_start"() <{level = 10 : i32, message = "bqd,bkd->bqk"}> : () -> ()
    %cst_77 = arith.constant dense<0.000000e+00> : vector<1x12x8xf32>
    %162 = tpu.matmul %160, %161, %cst_77 {dimension_numbers = #tpu.dot_dimension_numbers<[2], [2], [1], [1], [0, 0, 0, 1, 1, 1], [0], [0]>} : vector<1x12x8xbf16>, vector<1x8x8xbf16>, vector<1x12x8xf32> -> vector<1x12x8xf32>
    %cst_78 = arith.constant -1.000000e+10 : f32
    "tpu.trace_stop"() : () -> ()
    %163 = vector.broadcast %cst_78 : f32 to vector<1x12x8xf32>
    %164 = arith.select %126, %163, %162 : vector<1x12x8xi1>, vector<1x12x8xf32>
    %cst_79 = arith.constant dense<0xFF800000> : vector<1x12xf32>
    %165 = vector.multi_reduction <maximumf>, %164, %cst_79 [2] : vector<1x12x8xf32> to vector<1x12xf32>
    %166 = vector.shape_cast %165 : vector<1x12xf32> to vector<1x12x1xf32>
    %167 = vector.broadcast %166 : vector<1x12x1xf32> to vector<1x12x8xf32>
    %168 = arith.subf %164, %167 : vector<1x12x8xf32>
    %169 = math.exp %168 : vector<1x12x8xf32>
    %cst_80 = arith.constant dense<0.000000e+00> : vector<1x12xf32>
    %170 = vector.multi_reduction <add>, %169, %cst_80 [2] : vector<1x12x8xf32> to vector<1x12xf32>
    %171 = vector.shape_cast %170 : vector<1x12xf32> to vector<1x12x1xf32>
    %172 = tpu.reciprocal %171 {approx = true} : vector<1x12x1xf32> -> vector<1x12x1xf32>
    %173 = vector.broadcast %172 : vector<1x12x1xf32> to vector<1x12x8xf32>
    %174 = arith.mulf %169, %173 : vector<1x12x8xf32>
    %175 = arith.truncf %174 : vector<1x12x8xf32> to vector<1x12x8xbf16>
    %176 = vector.extract_strided_slice %139 {offsets = [0, 0, 8], sizes = [1, 8, 8], strides = [1, 1, 1]} : vector<1x8x32xbf16> to vector<1x8x8xbf16>
    "tpu.trace_start"() <{level = 10 : i32, message = "bqk,bkd->bqd"}> : () -> ()
    %cst_81 = arith.constant dense<0.000000e+00> : vector<1x12x8xf32>
    %177 = tpu.matmul %175, %176, %cst_81 {dimension_numbers = #tpu.dot_dimension_numbers<[2], [1], [1], [2], [0, 0, 0, 1, 1, 2], [0], [0]>} : vector<1x12x8xbf16>, vector<1x8x8xbf16>, vector<1x12x8xf32> -> vector<1x12x8xf32>
    "tpu.trace_stop"() : () -> ()
    %c0_82 = arith.constant 0 : index
    %c0_83 = arith.constant 0 : index
    %c8_84 = arith.constant 8 : index
    %178 = vector.load %arg14[%c0_82, %c0_83, %c8_84] : memref<1x12x32xf32, #tpu.memory_space<vmem>>, vector<1x12x8xf32>
    tpu.vector_store %arg14[%c0_82, %c0_83, %c8_84], %177 {strides = array<i32>} : memref<1x12x32xf32, #tpu.memory_space<vmem>>, vector<1x12x8xf32>,
    %179 = vector.extract_strided_slice %140 {offsets = [0, 0, 16], sizes = [1, 12, 8], strides = [1, 1, 1]} : vector<1x12x32xbf16> to vector<1x12x8xbf16>
    %180 = vector.extract_strided_slice %137 {offsets = [0, 0, 16], sizes = [1, 8, 8], strides = [1, 1, 1]} : vector<1x8x32xbf16> to vector<1x8x8xbf16>
    "tpu.trace_start"() <{level = 10 : i32, message = "bqd,bkd->bqk"}> : () -> ()
    %cst_85 = arith.constant dense<0.000000e+00> : vector<1x12x8xf32>
    %181 = tpu.matmul %179, %180, %cst_85 {dimension_numbers = #tpu.dot_dimension_numbers<[2], [2], [1], [1], [0, 0, 0, 1, 1, 1], [0], [0]>} : vector<1x12x8xbf16>, vector<1x8x8xbf16>, vector<1x12x8xf32> -> vector<1x12x8xf32>
    %cst_86 = arith.constant -1.000000e+10 : f32
    "tpu.trace_stop"() : () -> ()
    %182 = vector.broadcast %cst_86 : f32 to vector<1x12x8xf32>
    %183 = arith.select %126, %182, %181 : vector<1x12x8xi1>, vector<1x12x8xf32>
    %cst_87 = arith.constant dense<0xFF800000> : vector<1x12xf32>
    %184 = vector.multi_reduction <maximumf>, %183, %cst_87 [2] : vector<1x12x8xf32> to vector<1x12xf32>
    %185 = vector.shape_cast %184 : vector<1x12xf32> to vector<1x12x1xf32>
    %186 = vector.broadcast %185 : vector<1x12x1xf32> to vector<1x12x8xf32>
    %187 = arith.subf %183, %186 : vector<1x12x8xf32>
    %188 = math.exp %187 : vector<1x12x8xf32>
    %cst_88 = arith.constant dense<0.000000e+00> : vector<1x12xf32>
    %189 = vector.multi_reduction <add>, %188, %cst_88 [2] : vector<1x12x8xf32> to vector<1x12xf32>
    %190 = vector.shape_cast %189 : vector<1x12xf32> to vector<1x12x1xf32>
    %191 = tpu.reciprocal %190 {approx = true} : vector<1x12x1xf32> -> vector<1x12x1xf32>
    %192 = vector.broadcast %191 : vector<1x12x1xf32> to vector<1x12x8xf32>
    %193 = arith.mulf %188, %192 : vector<1x12x8xf32>
    %194 = arith.truncf %193 : vector<1x12x8xf32> to vector<1x12x8xbf16>
    %195 = vector.extract_strided_slice %139 {offsets = [0, 0, 16], sizes = [1, 8, 8], strides = [1, 1, 1]} : vector<1x8x32xbf16> to vector<1x8x8xbf16>
    "tpu.trace_start"() <{level = 10 : i32, message = "bqk,bkd->bqd"}> : () -> ()
    %cst_89 = arith.constant dense<0.000000e+00> : vector<1x12x8xf32>
    %196 = tpu.matmul %194, %195, %cst_89 {dimension_numbers = #tpu.dot_dimension_numbers<[2], [1], [1], [2], [0, 0, 0, 1, 1, 2], [0], [0]>} : vector<1x12x8xbf16>, vector<1x8x8xbf16>, vector<1x12x8xf32> -> vector<1x12x8xf32>
    "tpu.trace_stop"() : () -> ()
    %c0_90 = arith.constant 0 : index
    %c0_91 = arith.constant 0 : index
    %c16_92 = arith.constant 16 : index
    %197 = vector.load %arg14[%c0_90, %c0_91, %c16_92] : memref<1x12x32xf32, #tpu.memory_space<vmem>>, vector<1x12x8xf32>
    tpu.vector_store %arg14[%c0_90, %c0_91, %c16_92], %196 {strides = array<i32>} : memref<1x12x32xf32, #tpu.memory_space<vmem>>, vector<1x12x8xf32>,
    %198 = vector.extract_strided_slice %140 {offsets = [0, 0, 24], sizes = [1, 12, 8], strides = [1, 1, 1]} : vector<1x12x32xbf16> to vector<1x12x8xbf16>
    %199 = vector.extract_strided_slice %137 {offsets = [0, 0, 24], sizes = [1, 8, 8], strides = [1, 1, 1]} : vector<1x8x32xbf16> to vector<1x8x8xbf16>
    "tpu.trace_start"() <{level = 10 : i32, message = "bqd,bkd->bqk"}> : () -> ()
    %cst_93 = arith.constant dense<0.000000e+00> : vector<1x12x8xf32>
    %200 = tpu.matmul %198, %199, %cst_93 {dimension_numbers = #tpu.dot_dimension_numbers<[2], [2], [1], [1], [0, 0, 0, 1, 1, 1], [0], [0]>} : vector<1x12x8xbf16>, vector<1x8x8xbf16>, vector<1x12x8xf32> -> vector<1x12x8xf32>
    %cst_94 = arith.constant -1.000000e+10 : f32
    "tpu.trace_stop"() : () -> ()
    %201 = vector.broadcast %cst_94 : f32 to vector<1x12x8xf32>
    %202 = arith.select %126, %201, %200 : vector<1x12x8xi1>, vector<1x12x8xf32>
    %cst_95 = arith.constant dense<0xFF800000> : vector<1x12xf32>
    %203 = vector.multi_reduction <maximumf>, %202, %cst_95 [2] : vector<1x12x8xf32> to vector<1x12xf32>
    %204 = vector.shape_cast %203 : vector<1x12xf32> to vector<1x12x1xf32>
    %205 = vector.broadcast %204 : vector<1x12x1xf32> to vector<1x12x8xf32>
    %206 = arith.subf %202, %205 : vector<1x12x8xf32>
    %207 = math.exp %206 : vector<1x12x8xf32>
    %cst_96 = arith.constant dense<0.000000e+00> : vector<1x12xf32>
    %208 = vector.multi_reduction <add>, %207, %cst_96 [2] : vector<1x12x8xf32> to vector<1x12xf32>
    %209 = vector.shape_cast %208 : vector<1x12xf32> to vector<1x12x1xf32>
    %210 = tpu.reciprocal %209 {approx = true} : vector<1x12x1xf32> -> vector<1x12x1xf32>
    %211 = vector.broadcast %210 : vector<1x12x1xf32> to vector<1x12x8xf32>
    %212 = arith.mulf %207, %211 : vector<1x12x8xf32>
    %213 = arith.truncf %212 : vector<1x12x8xf32> to vector<1x12x8xbf16>
    %214 = vector.extract_strided_slice %139 {offsets = [0, 0, 24], sizes = [1, 8, 8], strides = [1, 1, 1]} : vector<1x8x32xbf16> to vector<1x8x8xbf16>
    "tpu.trace_start"() <{level = 10 : i32, message = "bqk,bkd->bqd"}> : () -> ()
    %cst_97 = arith.constant dense<0.000000e+00> : vector<1x12x8xf32>
    %215 = tpu.matmul %213, %214, %cst_97 {dimension_numbers = #tpu.dot_dimension_numbers<[2], [1], [1], [2], [0, 0, 0, 1, 1, 2], [0], [0]>} : vector<1x12x8xbf16>, vector<1x8x8xbf16>, vector<1x12x8xf32> -> vector<1x12x8xf32>
    "tpu.trace_stop"() : () -> ()
    %c0_98 = arith.constant 0 : index
    %c0_99 = arith.constant 0 : index
    %c24_100 = arith.constant 24 : index
    %216 = vector.load %arg14[%c0_98, %c0_99, %c24_100] : memref<1x12x32xf32, #tpu.memory_space<vmem>>, vector<1x12x8xf32>
    tpu.vector_store %arg14[%c0_98, %c0_99, %c24_100], %215 {strides = array<i32>} : memref<1x12x32xf32, #tpu.memory_space<vmem>>, vector<1x12x8xf32>,
    %c0_101 = arith.constant 0 : index
    %c0_102 = arith.constant 0 : index
    %c0_103 = arith.constant 0 : index
    %217 = vector.load %arg14[%c0_101, %c0_102, %c0_103] : memref<1x12x32xf32, #tpu.memory_space<vmem>>, vector<1x12x32xf32>
    %218 = arith.addf %121, %217 : vector<1x12x32xf32>
    %219 = vector.shape_cast %218 : vector<1x12x32xf32> to vector<12x32xf32>
    %220 = arith.truncf %219 : vector<12x32xf32> to vector<12x32xbf16>
    %cst_104 = arith.constant dense<0.000000e+00> : vector<12x32xf32>
    %221 = tpu.matmul %220, %129, %cst_104 {dimension_numbers = #tpu.dot_dimension_numbers<[1], [0], [0], [1], [0, 0, 1, 1], [], []>} : vector<12x32xbf16>, vector<32x32xbf16>, vector<12x32xf32> -> vector<12x32xf32>
    %222 = vector.broadcast %4 : vector<1x32xf32> to vector<12x32xf32>
    %223 = arith.addf %221, %222 : vector<12x32xf32>
    %cst_105 = arith.constant 0.000000e+00 : f32
    %224 = vector.broadcast %cst_105 : f32 to vector<12x32xf32>
    %225 = arith.maximumf %223, %224 : vector<12x32xf32>
    %226 = vector.shape_cast %225 : vector<12x32xf32> to vector<1x12x32xf32>
    %227 = arith.addf %218, %226 : vector<1x12x32xf32>
    %c0_106 = arith.constant 0 : index
    %c0_107 = arith.constant 0 : index
    %c0_108 = arith.constant 0 : index
    %228 = vector.load %arg12[%c0_106, %c0_107, %c0_108] : memref<1x12x32xf32, #tpu.memory_space<vmem>>, vector<1x12x32xf32>
    tpu.vector_store %arg12[%c0_106, %c0_107, %c0_108], %227 {strides = array<i32>} : memref<1x12x32xf32, #tpu.memory_space<vmem>>, vector<1x12x32xf32>,
    return
  }
  func.func @transform_0(%arg0: i32) -> (i32, i32, i32) {
    %c0_i32 = arith.constant 0 : i32
    %c0_i32_0 = arith.constant 0 : i32
    %c0_i32_1 = arith.constant 0 : i32
    return %arg0, %c0_i32, %c0_i32_0 : i32, i32, i32
  }
  func.func @transform_1(%arg0: i32) -> (i32, i32, i32) {
    %c0_i32 = arith.constant 0 : i32
    %c0_i32_0 = arith.constant 0 : i32
    %c0_i32_1 = arith.constant 0 : i32
    return %arg0, %c0_i32, %c0_i32_0 : i32, i32, i32
  }
  func.func @transform_2(%arg0: i32) -> (i32, i32, i32) {
    %c0_i32 = arith.constant 0 : i32
    %c0_i32_0 = arith.constant 0 : i32
    %c0_i32_1 = arith.constant 0 : i32
    return %arg0, %c0_i32, %c0_i32_0 : i32, i32, i32
  }
  func.func @transform_3(%arg0: i32) -> (i32, i32, i32) {
    %c0_i32 = arith.constant 0 : i32
    %c0_i32_0 = arith.constant 0 : i32
    %c0_i32_1 = arith.constant 0 : i32
    return %arg0, %c0_i32, %c0_i32_0 : i32, i32, i32
  }
  func.func @transform_4(%arg0: i32) -> (i32, i32) {
    %c0_i32 = arith.constant 0 : i32
    %c0_i32_0 = arith.constant 0 : i32
    %c0_i32_1 = arith.constant 0 : i32
    return %c0_i32, %c0_i32_0 : i32, i32
  }
  func.func @transform_5(%arg0: i32) -> (i32, i32) {
    %c0_i32 = arith.constant 0 : i32
    %c0_i32_0 = arith.constant 0 : i32
    %c0_i32_1 = arith.constant 0 : i32
    return %c0_i32, %c0_i32_0 : i32, i32
  }
  func.func @transform_6(%arg0: i32) -> (i32, i32) {
    %c0_i32 = arith.constant 0 : i32
    %c0_i32_0 = arith.constant 0 : i32
    %c0_i32_1 = arith.constant 0 : i32
    return %c0_i32, %c0_i32_0 : i32, i32
  }
  func.func @transform_7(%arg0: i32) -> (i32, i32) {
    %c0_i32 = arith.constant 0 : i32
    %c0_i32_0 = arith.constant 0 : i32
    %c0_i32_1 = arith.constant 0 : i32
    return %c0_i32, %c0_i32_0 : i32, i32
  }
  func.func @transform_8(%arg0: i32) -> (i32, i32, i32) {
    %c0_i32 = arith.constant 0 : i32
    %c0_i32_0 = arith.constant 0 : i32
    %c0_i32_1 = arith.constant 0 : i32
    %c0_i32_2 = arith.constant 0 : i32
    return %c0_i32, %c0_i32_0, %c0_i32_1 : i32, i32, i32
  }
  func.func @transform_9(%arg0: i32) -> (i32, i32) {
    %c0_i32 = arith.constant 0 : i32
    %c0_i32_0 = arith.constant 0 : i32
    %c0_i32_1 = arith.constant 0 : i32
    return %c0_i32, %c0_i32_0 : i32, i32
  }
  func.func @transform_10(%arg0: i32) -> (i32, i32) {
    %c0_i32 = arith.constant 0 : i32
    %c0_i32_0 = arith.constant 0 : i32
    %c0_i32_1 = arith.constant 0 : i32
    return %c0_i32, %c0_i32_0 : i32, i32
  }
  func.func @transform_11(%arg0: i32) -> (i32, i32, i32) {
    %c0_i32 = arith.constant 0 : i32
    %c0_i32_0 = arith.constant 0 : i32
    %c0_i32_1 = arith.constant 0 : i32
    return %arg0, %c0_i32, %c0_i32_0 : i32, i32, i32
  }
}

</mosaic_0001>

<llo_original>
// kernel: imab_forward.1
$region0: #{imab_forward.1}
  #allocation0 [shape = 'u32[]', space=smem, size = 0x4, offset = 0x4, fixed_abs, tag = 'smem constant byte address 0x4 - core index']
  #allocation1 [shape = 'u32[144,128]{1,0:T(1,128)}', space=vmem, size = 0x12000, scoped, tag = 'internal scratch']
  #allocation2 [shape = 'f32[1,8,32]{2,1,0:T(8,128)}', space=vmem, size = 0x1000, scoped, tag = 'scratch operand']
  #allocation3 [shape = 'f32[1,12,32]{2,1,0:T(8,128)}', space=vmem, size = 0x2000, scoped, tag = 'scratch operand']
  %s0 = inlined_call_operand.vmem [shape: f32[2,12,16], index: 0, kind: input, shape index: {}]
  %s1 = inlined_call_operand.vmem [shape: f32[2,10,16], index: 1, kind: input, shape index: {}]
  %s2 = inlined_call_operand.vmem [shape: f32[2,1,10], index: 2, kind: input, shape index: {}]
  %s3 = inlined_call_operand.vmem [shape: f32[2,12,1], index: 3, kind: input, shape index: {}]
  %s4 = inlined_call_operand.vmem [shape: f32[8,32], index: 4, kind: input, shape index: {}]
  %s5 = inlined_call_operand.vmem [shape: bf16[16,64], index: 5, kind: input, shape index: {}]
  %s6 = inlined_call_operand.vmem [shape: bf16[16,32], index: 6, kind: input, shape index: {}]
  %s7 = inlined_call_operand.vmem [shape: bf16[32,64], index: 7, kind: input, shape index: {}]
  %s8 = inlined_call_operand.vmem [shape: bf16[2,32,32], index: 8, kind: input, shape index: {}]
  %s9 = inlined_call_operand.vmem [shape: f32[1,96], index: 9, kind: input, shape index: {}]
  %s10 = inlined_call_operand.vmem [shape: f32[1,128], index: 10, kind: input, shape index: {}]
  %s11 = inlined_call_operand.vmem [shape: f32[2,12,32], index: 11, kind: output, shape index: {}]
  %s12 = sld [smem:[#allocation0]]
  $region77: #{imab_forward.1} parent=0
    _
  %s14 = ssub.s32 1, %s12
  %s15 = scalar_select 0, %s14, %s12
  loop: start=0, step=1, limit=4
  $region2: #{imab_forward.1} parent=0 // loop_pre_header
    _
  $region3: #{imab_forward.1} parent=0 // loop_header
    %s17 = sphi 0, %s21
    %p18 = scmp.ge.s32.totalorder %s17, 4
    %s27 = sphi 0, %s29
    %s30 = sphi 0, %s27
    %s31 = sphi 0, %s30
    %s47 = sphi 0, %s31
    %s53 = sphi 0, %s55
    %s56 = sphi 0, %s53
    %s57 = sphi 0, %s56
    %s73 = sphi 0, %s57
    %s79 = sphi 0, %s81
    %s82 = sphi 0, %s79
    %s83 = sphi 0, %s82
    %s99 = sphi 0, %s83
    %s105 = sphi 0, %s107
    %s108 = sphi 0, %s105
    %s109 = sphi 0, %s108
    %s125 = sphi 0, %s109
    %s129 = sphi 0, %s129
    %s131 = sphi 0, %s129
    %s132 = sphi 0, %s131
    %s146 = sphi 0, %s132
    %s150 = sphi 0, %s150
    %s152 = sphi 0, %s150
    %s153 = sphi 0, %s152
    %s167 = sphi 0, %s153
    %s171 = sphi 0, %s171
    %s173 = sphi 0, %s171
    %s174 = sphi 0, %s173
    %s188 = sphi 0, %s174
    %s192 = sphi 0, %s192
    %s194 = sphi 0, %s192
    %s195 = sphi 0, %s194
    %s209 = sphi 0, %s195
    %s213 = sphi 0, %s213
    %s215 = sphi 0, %s213
    %s216 = sphi 0, %s215
    %s230 = sphi 0, %s216
    %s234 = sphi 0, %s234
    %s236 = sphi 0, %s234
    %s237 = sphi 0, %s236
    %s251 = sphi 0, %s237
    %s255 = sphi 0, %s255
    %s257 = sphi 0, %s255
    %s258 = sphi 0, %s257
    %s272 = sphi 0, %s258
    %s278 = sphi 0, %s280
    %s281 = sphi 0, %s278
    %s282 = sphi 0, %s281
    %s298 = sphi 0, %s282
  $region4: #{imab_forward.1} parent=0 // loop_header_branch
    %20 = sbr.rel (%p18) target = $region8
  $region5: #{imab_forward.1} parent=0 // loop_body
    %s22 = ssub.s32 %s17, 1
    %s23 = ssub.s32 %s17, 2
    %s24 = sadd.s32 %s17, 1
    %s25 = ssub.s32 %s17, %s24
    %p26 = scmp.eq.s32.totalorder %s25, 0
    %s28 = sadd.s32 %s27, 1
    %s29 = scalar_select %p26, %s27, %s28
    %p32 = pneg %p26
    %p33 = scmp.eq.s32.totalorder %s17, 1
    %p34 = por %p32, %p33
    %p35 = scmp.ne.s32.totalorder %s27, %s30
    %p36 = scmp.eq.s32.totalorder %s17, 0
    %p37 = por %p35, %p36
    %p38 = scmp.ne.s32.totalorder %s27, %s30
    %p39 = scmp.eq.s32.totalorder %s22, 1
    %p40 = por %p38, %p39
    %p41 = scmp.ne.s32.totalorder %s30, %s31
    %p42 = scmp.eq.s32.totalorder %s22, 0
    %p43 = por %p41, %p42
    %p44 = scmp.ne.s32.totalorder %s30, %s31
    %p45 = scmp.eq.s32.totalorder %s23, 1
    %p46 = por %p44, %p45
    %p48 = scmp.ne.s32.totalorder %s31, %s47
    %p49 = scmp.eq.s32.totalorder %s23, 0
    %p50 = por %p48, %p49
    %s51 = ssub.s32 %s17, %s24
    %p52 = scmp.eq.s32.totalorder %s51, 0
    %s54 = sadd.s32 %s53, 1
    %s55 = scalar_select %p52, %s53, %s54
    %p58 = pneg %p52
    %p59 = scmp.eq.s32.totalorder %s17, 1
    %p60 = por %p58, %p59
    %p61 = scmp.ne.s32.totalorder %s53, %s56
    %p62 = scmp.eq.s32.totalorder %s17, 0
    %p63 = por %p61, %p62
    %p64 = scmp.ne.s32.totalorder %s53, %s56
    %p65 = scmp.eq.s32.totalorder %s22, 1
    %p66 = por %p64, %p65
    %p67 = scmp.ne.s32.totalorder %s56, %s57
    %p68 = scmp.eq.s32.totalorder %s22, 0
    %p69 = por %p67, %p68
    %p70 = scmp.ne.s32.totalorder %s56, %s57
    %p71 = scmp.eq.s32.totalorder %s23, 1
    %p72 = por %p70, %p71
    %p74 = scmp.ne.s32.totalorder %s57, %s73
    %p75 = scmp.eq.s32.totalorder %s23, 0
    %p76 = por %p74, %p75
    %s77 = ssub.s32 %s17, %s24
    %p78 = scmp.eq.s32.totalorder %s77, 0
    %s80 = sadd.s32 %s79, 1
    %s81 = scalar_select %p78, %s79, %s80
    %p84 = pneg %p78
    %p85 = scmp.eq.s32.totalorder %s17, 1
    %p86 = por %p84, %p85
    %p87 = scmp.ne.s32.totalorder %s79, %s82
    %p88 = scmp.eq.s32.totalorder %s17, 0
    %p89 = por %p87, %p88
    %p90 = scmp.ne.s32.totalorder %s79, %s82
    %p91 = scmp.eq.s32.totalorder %s22, 1
    %p92 = por %p90, %p91
    %p93 = scmp.ne.s32.totalorder %s82, %s83
    %p94 = scmp.eq.s32.totalorder %s22, 0
    %p95 = por %p93, %p94
    %p96 = scmp.ne.s32.totalorder %s82, %s83
    %p97 = scmp.eq.s32.totalorder %s23, 1
    %p98 = por %p96, %p97
    %p100 = scmp.ne.s32.totalorder %s83, %s99
    %p101 = scmp.eq.s32.totalorder %s23, 0
    %p102 = por %p100, %p101
    %s103 = ssub.s32 %s17, %s24
    %p104 = scmp.eq.s32.totalorder %s103, 0
    %s106 = sadd.s32 %s105, 1
    %s107 = scalar_select %p104, %s105, %s106
    %p110 = pneg %p104
    %p111 = scmp.eq.s32.totalorder %s17, 1
    %p112 = por %p110, %p111
    %p113 = scmp.ne.s32.totalorder %s105, %s108
    %p114 = scmp.eq.s32.totalorder %s17, 0
    %p115 = por %p113, %p114
    %p116 = scmp.ne.s32.totalorder %s105, %s108
    %p117 = scmp.eq.s32.totalorder %s22, 1
    %p118 = por %p116, %p117
    %p119 = scmp.ne.s32.totalorder %s108, %s109
    %p120 = scmp.eq.s32.totalorder %s22, 0
    %p121 = por %p119, %p120
    %p122 = scmp.ne.s32.totalorder %s108, %s109
    %p123 = scmp.eq.s32.totalorder %s23, 1
    %p124 = por %p122, %p123
    %p126 = scmp.ne.s32.totalorder %s109, %s125
    %p127 = scmp.eq.s32.totalorder %s23, 0
    %p128 = por %p126, %p127
    %s130 = sadd.s32 %s129, 1
    %p133 = scmp.eq.s32.totalorder %s17, 1
    %p134 = scmp.ne.s32.totalorder %s129, %s131
    %p135 = scmp.eq.s32.totalorder %s17, 0
    %p136 = por %p134, %p135
    %p137 = scmp.ne.s32.totalorder %s129, %s131
    %p138 = scmp.eq.s32.totalorder %s22, 1
    %p139 = por %p137, %p138
    %p140 = scmp.ne.s32.totalorder %s131, %s132
    %p141 = scmp.eq.s32.totalorder %s22, 0
    %p142 = por %p140, %p141
    %p143 = scmp.ne.s32.totalorder %s131, %s132
    %p144 = scmp.eq.s32.totalorder %s23, 1
    %p145 = por %p143, %p144
    %p147 = scmp.ne.s32.totalorder %s132, %s146
    %p148 = scmp.eq.s32.totalorder %s23, 0
    %p149 = por %p147, %p148
    %s151 = sadd.s32 %s150, 1
    %p154 = scmp.eq.s32.totalorder %s17, 1
    %p155 = scmp.ne.s32.totalorder %s150, %s152
    %p156 = scmp.eq.s32.totalorder %s17, 0
    %p157 = por %p155, %p156
    %p158 = scmp.ne.s32.totalorder %s150, %s152
    %p159 = scmp.eq.s32.totalorder %s22, 1
    %p160 = por %p158, %p159
    %p161 = scmp.ne.s32.totalorder %s152, %s153
    %p162 = scmp.eq.s32.totalorder %s22, 0
    %p163 = por %p161, %p162
    %p164 = scmp.ne.s32.totalorder %s152, %s153
    %p165 = scmp.eq.s32.totalorder %s23, 1
    %p166 = por %p164, %p165
    %p168 = scmp.ne.s32.totalorder %s153, %s167
    %p169 = scmp.eq.s32.totalorder %s23, 0
    %p170 = por %p168, %p169
    %s172 = sadd.s32 %s171, 1
    %p175 = scmp.eq.s32.totalorder %s17, 1
    %p176 = scmp.ne.s32.totalorder %s171, %s173
    %p177 = scmp.eq.s32.totalorder %s17, 0
    %p178 = por %p176, %p177
    %p179 = scmp.ne.s32.totalorder %s171, %s173
    %p180 = scmp.eq.s32.totalorder %s22, 1
    %p181 = por %p179, %p180
    %p182 = scmp.ne.s32.totalorder %s173, %s174
    %p183 = scmp.eq.s32.totalorder %s22, 0
    %p184 = por %p182, %p183
    %p185 = scmp.ne.s32.totalorder %s173, %s174
    %p186 = scmp.eq.s32.totalorder %s23, 1
    %p187 = por %p185, %p186
    %p189 = scmp.ne.s32.totalorder %s174, %s188
    %p190 = scmp.eq.s32.totalorder %s23, 0
    %p191 = por %p189, %p190
    %s193 = sadd.s32 %s192, 1
    %p196 = scmp.eq.s32.totalorder %s17, 1
    %p197 = scmp.ne.s32.totalorder %s192, %s194
    %p198 = scmp.eq.s32.totalorder %s17, 0
    %p199 = por %p197, %p198
    %p200 = scmp.ne.s32.totalorder %s192, %s194
    %p201 = scmp.eq.s32.totalorder %s22, 1
    %p202 = por %p200, %p201
    %p203 = scmp.ne.s32.totalorder %s194, %s195
    %p204 = scmp.eq.s32.totalorder %s22, 0
    %p205 = por %p203, %p204
    %p206 = scmp.ne.s32.totalorder %s194, %s195
    %p207 = scmp.eq.s32.totalorder %s23, 1
    %p208 = por %p206, %p207
    %p210 = scmp.ne.s32.totalorder %s195, %s209
    %p211 = scmp.eq.s32.totalorder %s23, 0
    %p212 = por %p210, %p211
    %s214 = sadd.s32 %s213, 1
    %p217 = scmp.eq.s32.totalorder %s17, 1
    %p218 = scmp.ne.s32.totalorder %s213, %s215
    %p219 = scmp.eq.s32.totalorder %s17, 0
    %p220 = por %p218, %p219
    %p221 = scmp.ne.s32.totalorder %s213, %s215
    %p222 = scmp.eq.s32.totalorder %s22, 1
    %p223 = por %p221, %p222
    %p224 = scmp.ne.s32.totalorder %s215, %s216
    %p225 = scmp.eq.s32.totalorder %s22, 0
    %p226 = por %p224, %p225
    %p227 = scmp.ne.s32.totalorder %s215, %s216
    %p228 = scmp.eq.s32.totalorder %s23, 1
    %p229 = por %p227, %p228
    %p231 = scmp.ne.s32.totalorder %s216, %s230
    %p232 = scmp.eq.s32.totalorder %s23, 0
    %p233 = por %p231, %p232
    %s235 = sadd.s32 %s234, 1
    %p238 = scmp.eq.s32.totalorder %s17, 1
    %p239 = scmp.ne.s32.totalorder %s234, %s236
    %p240 = scmp.eq.s32.totalorder %s17, 0
    %p241 = por %p239, %p240
    %p242 = scmp.ne.s32.totalorder %s234, %s236
    %p243 = scmp.eq.s32.totalorder %s22, 1
    %p244 = por %p242, %p243
    %p245 = scmp.ne.s32.totalorder %s236, %s237
    %p246 = scmp.eq.s32.totalorder %s22, 0
    %p247 = por %p245, %p246
    %p248 = scmp.ne.s32.totalorder %s236, %s237
    %p249 = scmp.eq.s32.totalorder %s23, 1
    %p250 = por %p248, %p249
    %p252 = scmp.ne.s32.totalorder %s237, %s251
    %p253 = scmp.eq.s32.totalorder %s23, 0
    %p254 = por %p252, %p253
    %s256 = sadd.s32 %s255, 1
    %p259 = scmp.eq.s32.totalorder %s17, 1
    %p260 = scmp.ne.s32.totalorder %s255, %s257
    %p261 = scmp.eq.s32.totalorder %s17, 0
    %p262 = por %p260, %p261
    %p263 = scmp.ne.s32.totalorder %s255, %s257
    %p264 = scmp.eq.s32.totalorder %s22, 1
    %p265 = por %p263, %p264
    %p266 = scmp.ne.s32.totalorder %s257, %s258
    %p267 = scmp.eq.s32.totalorder %s22, 0
    %p268 = por %p266, %p267
    %p269 = scmp.ne.s32.totalorder %s257, %s258
    %p270 = scmp.eq.s32.totalorder %s23, 1
    %p271 = por %p269, %p270
    %p273 = scmp.ne.s32.totalorder %s258, %s272
    %p274 = scmp.eq.s32.totalorder %s23, 0
    %p275 = por %p273, %p274
    %s276 = ssub.s32 %s17, %s24
    %p277 = scmp.eq.s32.totalorder %s276, 0
    %s279 = sadd.s32 %s278, 1
    %s280 = scalar_select %p277, %s278, %s279
    %p283 = pneg %p277
    %p284 = scmp.eq.s32.totalorder %s17, 1
    %p285 = por %p283, %p284
    %p286 = scmp.ne.s32.totalorder %s278, %s281
    %p287 = scmp.eq.s32.totalorder %s17, 0
    %p288 = por %p286, %p287
    %p289 = scmp.ne.s32.totalorder %s278, %s281
    %p290 = scmp.eq.s32.totalorder %s22, 1
    %p291 = por %p289, %p290
    %p292 = scmp.ne.s32.totalorder %s281, %s282
    %p293 = scmp.eq.s32.totalorder %s22, 0
    %p294 = por %p292, %p293
    %p295 = scmp.ne.s32.totalorder %s281, %s282
    %p296 = scmp.eq.s32.totalorder %s23, 1
    %p297 = por %p295, %p296
    %p299 = scmp.ne.s32.totalorder %s282, %s298
    %p300 = scmp.eq.s32.totalorder %s23, 0
    %p301 = por %p299, %p300
    %p302 = scmp.le.s32.totalorder 1, %s17
    %p303 = scmp.lt.s32.totalorder %s17, 3
    %p304 = pnand %p302, %p303
    %p305 = pneg %p304
    // Predicated region
    $region9: #{imab_forward.1} parent=5 // pred_check
      _
    $region10: #{imab_forward.1} parent=5 // pred_check_branch
      %307 = sbr.rel (%p304) target = $region12
    $region11: #{imab_forward.1} parent=5 // pred_region
      %s308 = ssub.s32 %s17, 1
      // Predicated region
      $region13: #{imab_forward.1} parent=11 // pred_check
        %p309 = pneg %p142
      $region14: #{imab_forward.1} parent=11 // pred_check_branch
        %311 = sbr.rel (%p309) target = $region16
      $region15: #{imab_forward.1} parent=11 // pred_region
        _
      $region16: #{imab_forward.1} parent=11 // pred_fallthru
        _
      // Predicated region
      $region17: #{imab_forward.1} parent=11 // pred_check
        %p312 = pneg %p163
      $region18: #{imab_forward.1} parent=11 // pred_check_branch
        %314 = sbr.rel (%p312) target = $region20
      $region19: #{imab_forward.1} parent=11 // pred_region
        _
      $region20: #{imab_forward.1} parent=11 // pred_fallthru
        _
      // Predicated region
      $region21: #{imab_forward.1} parent=11 // pred_check
        %p315 = pneg %p184
      $region22: #{imab_forward.1} parent=11 // pred_check_branch
        %317 = sbr.rel (%p315) target = $region24
      $region23: #{imab_forward.1} parent=11 // pred_region
        _
      $region24: #{imab_forward.1} parent=11 // pred_fallthru
        _
      // Predicated region
      $region25: #{imab_forward.1} parent=11 // pred_check
        %p318 = pneg %p205
      $region26: #{imab_forward.1} parent=11 // pred_check_branch
        %320 = sbr.rel (%p318) target = $region28
      $region27: #{imab_forward.1} parent=11 // pred_region
        _
      $region28: #{imab_forward.1} parent=11 // pred_fallthru
        _
      // Predicated region
      $region29: #{imab_forward.1} parent=11 // pred_check
        %p321 = pneg %p226
      $region30: #{imab_forward.1} parent=11 // pred_check_branch
        %323 = sbr.rel (%p321) target = $region32
      $region31: #{imab_forward.1} parent=11 // pred_region
        _
      $region32: #{imab_forward.1} parent=11 // pred_fallthru
        _
      // Predicated region
      $region33: #{imab_forward.1} parent=11 // pred_check
        %p324 = pneg %p247
      $region34: #{imab_forward.1} parent=11 // pred_check_branch
        %326 = sbr.rel (%p324) target = $region36
      $region35: #{imab_forward.1} parent=11 // pred_region
        _
      $region36: #{imab_forward.1} parent=11 // pred_fallthru
        _
      // Predicated region
      $region37: #{imab_forward.1} parent=11 // pred_check
        %p327 = pneg %p268
      $region38: #{imab_forward.1} parent=11 // pred_check_branch
        %329 = sbr.rel (%p327) target = $region40
      $region39: #{imab_forward.1} parent=11 // pred_region
        _
      $region40: #{imab_forward.1} parent=11 // pred_fallthru
        _
    $region12: #{imab_forward.1} parent=5 // pred_fallthru
      _
    %p330 = scmp.lt.s32.totalorder %s17, 2
    // Predicated region
    $region41: #{imab_forward.1} parent=5 // pred_check
      %p331 = pneg %p330
    $region42: #{imab_forward.1} parent=5 // pred_check_branch
      %333 = sbr.rel (%p331) target = $region44
    $region43: #{imab_forward.1} parent=5 // pred_region
      // Predicated region
      $region45: #{imab_forward.1} parent=43 // pred_check
        %p334 = pneg %p37
      $region46: #{imab_forward.1} parent=43 // pred_check_branch
        %336 = sbr.rel (%p334) target = $region48
      $region47: #{imab_forward.1} parent=43 // pred_region
        %p337 = scmp.lt.s32.totalorder %s17, 1
        %s338 = scalar_select %p337, %s17, 1
        %s339 = smul.addr %s338, 2
        %s340 = smul.addr %s339, 8
        %s341 = scalar_lea.vmem %s0, %s340
      $region48: #{imab_forward.1} parent=43 // pred_fallthru
        _
      // Predicated region
      $region49: #{imab_forward.1} parent=43 // pred_check
        %p342 = pneg %p63
      $region50: #{imab_forward.1} parent=43 // pred_check_branch
        %344 = sbr.rel (%p342) target = $region52
      $region51: #{imab_forward.1} parent=43 // pred_region
        %p345 = scmp.lt.s32.totalorder %s17, 1
        %s346 = scalar_select %p345, %s17, 1
        %s347 = smul.addr %s346, 2
        %s348 = smul.addr %s347, 8
        %s349 = scalar_lea.vmem %s1, %s348
      $region52: #{imab_forward.1} parent=43 // pred_fallthru
        _
      // Predicated region
      $region53: #{imab_forward.1} parent=43 // pred_check
        %p350 = pneg %p89
      $region54: #{imab_forward.1} parent=43 // pred_check_branch
        %352 = sbr.rel (%p350) target = $region56
      $region55: #{imab_forward.1} parent=43 // pred_region
        %p353 = scmp.lt.s32.totalorder %s17, 1
        %s354 = scalar_select %p353, %s17, 1
        %s355 = scalar_lea.vmem %s2, %s354
      $region56: #{imab_forward.1} parent=43 // pred_fallthru
        _
      // Predicated region
      $region57: #{imab_forward.1} parent=43 // pred_check
        %p356 = pneg %p115
      $region58: #{imab_forward.1} parent=43 // pred_check_branch
        %358 = sbr.rel (%p356) target = $region60
      $region59: #{imab_forward.1} parent=43 // pred_region
        %p359 = scmp.lt.s32.totalorder %s17, 1
        %s360 = scalar_select %p359, %s17, 1
        %s361 = smul.addr %s360, 2
        %s362 = smul.addr %s361, 8
        %s363 = scalar_lea.vmem %s3, %s362
      $region60: #{imab_forward.1} parent=43 // pred_fallthru
        _
    $region44: #{imab_forward.1} parent=5 // pred_fallthru
      _
    %p364 = scmp.le.s32.totalorder 1, %s17
    %p365 = scmp.lt.s32.totalorder %s17, 3
    %p366 = pnand %p364, %p365
    %p367 = pneg %p366
    // Predicated region
    $region61: #{imab_forward.1} parent=5 // pred_check
      _
    $region62: #{imab_forward.1} parent=5 // pred_check_branch
      %369 = sbr.rel (%p366) target = $region64
    $region63: #{imab_forward.1} parent=5 // pred_region
      %s370 = ssub.s32 %s17, 1
      %p371 = scmp.lt.s32.totalorder %s22, 1
      %s372 = scalar_select %p371, %s22, 1
      %s373 = smul.addr %s372, 2
      %s374 = smul.addr %s373, 8
      %s375 = scalar_lea.vmem %s0, %s374
      %p376 = pneg %p43
      %p377 = pneg %p40
      %p378 = scmp.lt.s32.totalorder %s22, 1
      %s379 = scalar_select %p378, %s22, 1
      %s380 = smul.addr %s379, 2
      %s381 = smul.addr %s380, 8
      %s382 = scalar_lea.vmem %s1, %s381
      %p383 = pneg %p69
      %p384 = pneg %p66
      %p385 = scmp.lt.s32.totalorder %s22, 1
      %s386 = scalar_select %p385, %s22, 1
      %s387 = scalar_lea.vmem %s2, %s386
      %p388 = pneg %p95
      %p389 = pneg %p92
      %p390 = scmp.lt.s32.totalorder %s22, 1
      %s391 = scalar_select %p390, %s22, 1
      %s392 = smul.addr %s391, 2
      %s393 = smul.addr %s392, 8
      %s394 = scalar_lea.vmem %s3, %s393
      %p395 = pneg %p121
      %p396 = pneg %p118
      %p397 = pneg %p142
      %p398 = pneg %p139
      %p399 = pneg %p163
      %p400 = pneg %p160
      %p401 = pneg %p184
      %p402 = pneg %p181
      %p403 = pneg %p205
      %p404 = pneg %p202
      %p405 = pneg %p226
      %p406 = pneg %p223
      %p407 = pneg %p247
      %p408 = pneg %p244
      %p409 = pneg %p268
      %p410 = pneg %p265
      %p411 = pneg %p294
      %p412 = pneg %p291
      %p413 = scmp.lt.s32.totalorder %s22, 1
      %s414 = scalar_select %p413, %s22, 1
      %s415 = smul.addr %s414, 2
      %s416 = smul.addr %s415, 8
      %s417 = scalar_lea.vmem %s11, %s416
      %p418 = scmp.lt.s32.totalorder %s22, 1
      %s419 = scalar_select %p418, %s22, 1
      %s420 = smul.addr %s419, 2
      %s421 = smul.addr %s420, 8
      %s422 = scalar_lea.vmem %s0, %s421
      %p423 = scmp.lt.s32.totalorder %s22, 1
      %s424 = scalar_select %p423, %s22, 1
      %s425 = smul.addr %s424, 2
      %s426 = smul.addr %s425, 8
      %s427 = scalar_lea.vmem %s1, %s426
      %p428 = scmp.lt.s32.totalorder %s22, 1
      %s429 = scalar_select %p428, %s22, 1
      %s430 = scalar_lea.vmem %s2, %s429
      %p431 = scmp.lt.s32.totalorder %s22, 1
      %s432 = scalar_select %p431, %s22, 1
      %s433 = smul.addr %s432, 2
      %s434 = smul.addr %s433, 8
      %s435 = scalar_lea.vmem %s3, %s434
      %p436 = scmp.lt.s32.totalorder %s22, 1
      %s437 = scalar_select %p436, %s22, 1
      %s438 = smul.addr %s437, 2
      %s439 = smul.addr %s438, 8
      %s440 = scalar_lea.vmem %s11, %s439
      %v442 = vld [vmem:[%s9] sm:$0x1]
      %v443 = vld [vmem:[%s10] sm:$0x1]
      %v444 = vld [vmem:[%s4] sm:$0xff]
      %v445 = vld [vmem:[%s430] sm:$0x1]
      %v447 = vlaneseq
      %v448 = vshrl.u32 %v447, 7
      %v449 = vsub.s32 0, %v448
      %v450 = vrot.slane %v445, %v449
      %vm452 = vcmp.eq.f32.partialorder %v450, 0.0
      %v453 = vld [vmem:[%s427] sm:$0xff]
      %v454 = vld [vmem:[%s427 + $0x8] sm:$0x3]
      %v455 = vld [vmem:[%s5] sm:$0xf]
      %v456 = vld [vmem:[%s5 + $0x4] sm:$0xf]
      %v457 = vld [vmem:[%s8] sm:$0xf]
      %v458 = vld [vmem:[%s8 + $0x4] sm:$0xf]
      %v459 = vld [vmem:[%s8 + $0x8] sm:$0xf]
      %v460 = vld [vmem:[%s8 + $0xc] sm:$0xf]
      %v461 = vpack.c.bf16 %v454, %v453
      %v463 = vlaneseq
      %v464 = vshrl.u32 %v463, 7
      %v465 = vsub.s32 0, %v464
      %v466 = vrot.slane %v442, %v465
      %v470 = vunpack.c.l.b16 %v455
      %v471 = vunpack.c.l.b16 %v456
      %v472 = vpack.c.b16 %v471, %v470
      %vm474 = vcmask 130048
      %v476 = vsel %vm474, %v461, 0
      %478 = vmatprep.subr.bf16.mxu0 0
      %479 = vmatpush1.bf16.msra.mxu0 %v472
      %480 = vmatprep.subr.bf16.mxu0 0
      %481 = vmatpush1.bf16.msra.mxu0 0
      %482 = vmatprep.subr.bf16.mxu0 0
      %483 = vmatpush1.bf16.msra.mxu0 0
      %484 = vmatprep.subr.bf16.mxu0 0
      %485 = vmatpush1.bf16.msra.mxu0 0
      %486 = vmatprep.subr.bf16.mxu0 0
      %487 = vmatpush1.bf16.msra.mxu0 0
      %488 = vmatprep.subr.bf16.mxu0 0
      %489 = vmatpush1.bf16.msra.mxu0 0
      %490 = vmatprep.subr.bf16.mxu0 0
      %491 = vmatpush1.bf16.msra.mxu0 0
      %492 = vmatprep.subr.bf16.mxu0 0
      %493 = vmatpush1.bf16.msra.mxu0 0
      %494 = vmatprep.subr.bf16.mxu0 0
      %495 = vmatpush1.bf16.msra.mxu0 0
      %496 = vmatprep.subr.bf16.mxu0 0
      %497 = vmatpush1.bf16.msra.mxu0 0
      %498 = vmatprep.subr.bf16.mxu0 0
      %499 = vmatpush1.bf16.msra.mxu0 0
      %500 = vmatprep.subr.bf16.mxu0 0
      %501 = vmatpush1.bf16.msra.mxu0 0
      %502 = vmatprep.subr.bf16.mxu0 0
      %503 = vmatpush1.bf16.msra.mxu0 0
      %504 = vmatprep.subr.bf16.mxu0 0
      %505 = vmatpush1.bf16.msra.mxu0 0
      %506 = vmatprep.subr.bf16.mxu0 0
      %507 = vmatpush1.bf16.msra.mxu0 0
      %508 = vmatprep.subr.bf16.mxu0 0
      %509 = vmatpush1.bf16.msra.mxu0 0
      %510 = vmatprep.mubr.bf16.mxu0 0
      %511 = vmatmul.mubr.bf16.gmra.mrb[0].mxu0 %v476
      %v512 = vpop.f32.mrb[0].mxu0
      %v513 = vadd.f32 %v466, %v512
      %v514 = vpop.f32.mrb[0].mxu0
      %v515 = vpop.f32.mrb[0].mxu0
      %v516 = vadd.f32 %v466, %v515
      %v517 = vpop.f32.mrb[0].mxu0
      %518 = vdwg.mxu0
      %v519 = vpack.c.bf16 %v516, %v513
      %v520 = vpack.c.bf16 %v444, %v444
      %vm521 = vcmask 64512
      %v523 = vsel %vm521, %v520, 0
      %v526 = vsel %vm521, %v519, 0
      %528 = vmatprep.subr.bf16.mxu0 0
      %529 = vmatpush1.bf16.xpose.msra.mxu0 %v526
      %530 = vmatprep.subr.bf16.mxu0 0
      %531 = vmatpush1.bf16.xpose.msra.mxu0 0
      %532 = vmatprep.subr.bf16.mxu0 0
      %533 = vmatpush1.bf16.xpose.msra.mxu0 0
      %534 = vmatprep.subr.bf16.mxu0 0
      %535 = vmatpush1.bf16.xpose.msra.mxu0 0
      %536 = vmatprep.subr.bf16.mxu0 0
      %537 = vmatpush1.bf16.xpose.msra.mxu0 0
      %538 = vmatprep.subr.bf16.mxu0 0
      %539 = vmatpush1.bf16.xpose.msra.mxu0 0
      %540 = vmatprep.subr.bf16.mxu0 0
      %541 = vmatpush1.bf16.xpose.msra.mxu0 0
      %542 = vmatprep.subr.bf16.mxu0 0
      %543 = vmatpush1.bf16.xpose.msra.mxu0 0
      %544 = vmatprep.subr.bf16.mxu0 0
      %545 = vmatpush1.bf16.xpose.msra.mxu0 0
      %546 = vmatprep.subr.bf16.mxu0 0
      %547 = vmatpush1.bf16.xpose.msra.mxu0 0
      %548 = vmatprep.subr.bf16.mxu0 0
      %549 = vmatpush1.bf16.xpose.msra.mxu0 0
      %550 = vmatprep.subr.bf16.mxu0 0
      %551 = vmatpush1.bf16.xpose.msra.mxu0 0
      %552 = vmatprep.subr.bf16.mxu0 0
      %553 = vmatpush1.bf16.xpose.msra.mxu0 0
      %554 = vmatprep.subr.bf16.mxu0 0
      %555 = vmatpush1.bf16.xpose.msra.mxu0 0
      %556 = vmatprep.subr.bf16.mxu0 0
      %557 = vmatpush1.bf16.xpose.msra.mxu0 0
      %558 = vmatprep.subr.bf16.mxu0 0
      %559 = vmatpush1.bf16.xpose.msra.mxu0 0
      %560 = vmatprep.mubr.bf16.mxu0 0
      %561 = vmatmul.mubr.bf16.gmra.mrb[0].mxu0 %v523
      %v562 = vpop.f32.mrb[0].mxu0
      %v563 = vadd.f32 0.0, %v562
      %v564 = vpop.f32.mrb[0].mxu0
      %v565 = vpop.f32.mrb[0].mxu0
      %v566 = vpop.f32.mrb[0].mxu0
      %567 = vdwg.mxu0
      %v568 = vsel %vm452, -1e+10, %v563
      %vm569 = vcmask 80896
      %v570 = vsel %vm569, %v568, -inf
      %571 = vmax.xlane.f32.xlu0 %v570
      %v572 = vpop.xlane.xlu0 %571
      %v573 = vsub.f32 %v568, %v572
      %v574 = vmul.f32 %v573, 1.442695
      %v575 = vpow.pop %v574
      %v576 = vsel %vm569, %v575, 0.0
      %577 = vadd.xlane.f32.xlu0 %v576
      %v578 = vpop.xlane.xlu0 %577
      %v579 = vrcp.pop %v578
      %v580 = vmul.f32 %v575, %v579
      %v581 = vpack.c.bf16 %v580, %v580
      %583 = vrot.lane.b32.xlu0 %v519, 96
      %v584 = vpop.permute.xlu0 %583
      %v586 = vsel %vm569, %v581, 0
      %vm588 = vcmask 1044480
      %v590 = vsel %vm588, %v584, 0
      %592 = vmatprep.subr.bf16.mxu0 0
      %593 = vmatpush1.bf16.msra.mxu0 %v590
      %594 = vmatprep.subr.bf16.mxu0 0
      %595 = vmatpush1.bf16.msra.mxu0 0
      %596 = vmatprep.subr.bf16.mxu0 0
      %597 = vmatpush1.bf16.msra.mxu0 0
      %598 = vmatprep.subr.bf16.mxu0 0
      %599 = vmatpush1.bf16.msra.mxu0 0
      %600 = vmatprep.subr.bf16.mxu0 0
      %601 = vmatpush1.bf16.msra.mxu0 0
      %602 = vmatprep.subr.bf16.mxu0 0
      %603 = vmatpush1.bf16.msra.mxu0 0
      %604 = vmatprep.subr.bf16.mxu0 0
      %605 = vmatpush1.bf16.msra.mxu0 0
      %606 = vmatprep.subr.bf16.mxu0 0
      %607 = vmatpush1.bf16.msra.mxu0 0
      %608 = vmatprep.subr.bf16.mxu0 0
      %609 = vmatpush1.bf16.msra.mxu0 0
      %610 = vmatprep.subr.bf16.mxu0 0
      %611 = vmatpush1.bf16.msra.mxu0 0
      %612 = vmatprep.subr.bf16.mxu0 0
      %613 = vmatpush1.bf16.msra.mxu0 0
      %614 = vmatprep.subr.bf16.mxu0 0
      %615 = vmatpush1.bf16.msra.mxu0 0
      %616 = vmatprep.subr.bf16.mxu0 0
      %617 = vmatpush1.bf16.msra.mxu0 0
      %618 = vmatprep.subr.bf16.mxu0 0
      %619 = vmatpush1.bf16.msra.mxu0 0
      %620 = vmatprep.subr.bf16.mxu0 0
      %621 = vmatpush1.bf16.msra.mxu0 0
      %622 = vmatprep.subr.bf16.mxu0 0
      %623 = vmatpush1.bf16.msra.mxu0 0
      %624 = vmatprep.mubr.bf16.mxu0 0
      %625 = vmatmul.mubr.bf16.gmra.mrb[0].mxu0 %v586
      %v626 = vpop.f32.mrb[0].mxu0
      %v627 = vadd.f32 0.0, %v626
      %v628 = vpop.f32.mrb[0].mxu0
      %v629 = vpop.f32.mrb[0].mxu0
      %v630 = vpop.f32.mrb[0].mxu0
      %631 = vdwg.mxu0
      %632 = vst.msk [vmem:[#allocation2] sm:$0xff] %vm521, %v627
      %634 = vrot.lane.b32.xlu0 %v520, 120
      %v635 = vpop.permute.xlu0 %634
      %636 = vrot.lane.b32.xlu0 %v519, 120
      %v637 = vpop.permute.xlu0 %636
      %v639 = vsel %vm521, %v635, 0
      %v642 = vsel %vm521, %v637, 0
      %644 = vmatprep.subr.bf16.mxu0 0
      %645 = vmatpush1.bf16.xpose.msra.mxu0 %v642
      %646 = vmatprep.subr.bf16.mxu0 0
      %647 = vmatpush1.bf16.xpose.msra.mxu0 0
      %648 = vmatprep.subr.bf16.mxu0 0
      %649 = vmatpush1.bf16.xpose.msra.mxu0 0
      %650 = vmatprep.subr.bf16.mxu0 0
      %651 = vmatpush1.bf16.xpose.msra.mxu0 0
      %652 = vmatprep.subr.bf16.mxu0 0
      %653 = vmatpush1.bf16.xpose.msra.mxu0 0
      %654 = vmatprep.subr.bf16.mxu0 0
      %655 = vmatpush1.bf16.xpose.msra.mxu0 0
      %656 = vmatprep.subr.bf16.mxu0 0
      %657 = vmatpush1.bf16.xpose.msra.mxu0 0
      %658 = vmatprep.subr.bf16.mxu0 0
      %659 = vmatpush1.bf16.xpose.msra.mxu0 0
      %660 = vmatprep.subr.bf16.mxu0 0
      %661 = vmatpush1.bf16.xpose.msra.mxu0 0
      %662 = vmatprep.subr.bf16.mxu0 0
      %663 = vmatpush1.bf16.xpose.msra.mxu0 0
      %664 = vmatprep.subr.bf16.mxu0 0
      %665 = vmatpush1.bf16.xpose.msra.mxu0 0
      %666 = vmatprep.subr.bf16.mxu0 0
      %667 = vmatpush1.bf16.xpose.msra.mxu0 0
      %668 = vmatprep.subr.bf16.mxu0 0
      %669 = vmatpush1.bf16.xpose.msra.mxu0 0
      %670 = vmatprep.subr.bf16.mxu0 0
      %671 = vmatpush1.bf16.xpose.msra.mxu0 0
      %672 = vmatprep.subr.bf16.mxu0 0
      %673 = vmatpush1.bf16.xpose.msra.mxu0 0
      %674 = vmatprep.subr.bf16.mxu0 0
      %675 = vmatpush1.bf16.xpose.msra.mxu0 0
      %676 = vmatprep.mubr.bf16.mxu0 0
      %677 = vmatmul.mubr.bf16.gmra.mrb[0].mxu0 %v639
      %v678 = vpop.f32.mrb[0].mxu0
      %v679 = vadd.f32 0.0, %v678
      %v680 = vpop.f32.mrb[0].mxu0
      %v681 = vpop.f32.mrb[0].mxu0
      %v682 = vpop.f32.mrb[0].mxu0
      %683 = vdwg.mxu0
      %v684 = vsel %vm452, -1e+10, %v679
      %v685 = vsel %vm569, %v684, -inf
      %686 = vmax.xlane.f32.xlu0 %v685
      %v687 = vpop.xlane.xlu0 %686
      %v688 = vsub.f32 %v684, %v687
      %v689 = vmul.f32 %v688, 1.442695
      %v690 = vpow.pop %v689
      %v691 = vsel %vm569, %v690, 0.0
      %692 = vadd.xlane.f32.xlu0 %v691
      %v693 = vpop.xlane.xlu0 %692
      %v694 = vrcp.pop %v693
      %v695 = vmul.f32 %v690, %v694
      %v696 = vpack.c.bf16 %v695, %v695
      %697 = vrot.lane.b32.xlu0 %v519, 88
      %v698 = vpop.permute.xlu0 %697
      %v700 = vsel %vm569, %v696, 0
      %v703 = vsel %vm588, %v698, 0
      %705 = vmatprep.subr.bf16.mxu0 0
      %706 = vmatpush1.bf16.msra.mxu0 %v703
      %707 = vmatprep.subr.bf16.mxu0 0
      %708 = vmatpush1.bf16.msra.mxu0 0
      %709 = vmatprep.subr.bf16.mxu0 0
      %710 = vmatpush1.bf16.msra.mxu0 0
      %711 = vmatprep.subr.bf16.mxu0 0
      %712 = vmatpush1.bf16.msra.mxu0 0
      %713 = vmatprep.subr.bf16.mxu0 0
      %714 = vmatpush1.bf16.msra.mxu0 0
      %715 = vmatprep.subr.bf16.mxu0 0
      %716 = vmatpush1.bf16.msra.mxu0 0
      %717 = vmatprep.subr.bf16.mxu0 0
      %718 = vmatpush1.bf16.msra.mxu0 0
      %719 = vmatprep.subr.bf16.mxu0 0
      %720 = vmatpush1.bf16.msra.mxu0 0
      %721 = vmatprep.subr.bf16.mxu0 0
      %722 = vmatpush1.bf16.msra.mxu0 0
      %723 = vmatprep.subr.bf16.mxu0 0
      %724 = vmatpush1.bf16.msra.mxu0 0
      %725 = vmatprep.subr.bf16.mxu0 0
      %726 = vmatpush1.bf16.msra.mxu0 0
      %727 = vmatprep.subr.bf16.mxu0 0
      %728 = vmatpush1.bf16.msra.mxu0 0
      %729 = vmatprep.subr.bf16.mxu0 0
      %730 = vmatpush1.bf16.msra.mxu0 0
      %731 = vmatprep.subr.bf16.mxu0 0
      %732 = vmatpush1.bf16.msra.mxu0 0
      %733 = vmatprep.subr.bf16.mxu0 0
      %734 = vmatpush1.bf16.msra.mxu0 0
      %735 = vmatprep.subr.bf16.mxu0 0
      %736 = vmatpush1.bf16.msra.mxu0 0
      %737 = vmatprep.mubr.bf16.mxu0 0
      %738 = vmatmul.mubr.bf16.gmra.mrb[0].mxu0 %v700
      %v739 = vpop.f32.mrb[0].mxu0
      %v740 = vadd.f32 0.0, %v739
      %v741 = vpop.f32.mrb[0].mxu0
      %v742 = vpop.f32.mrb[0].mxu0
      %v743 = vpop.f32.mrb[0].mxu0
      %744 = vdwg.mxu0
      %746 = vrot.lane.b32.xlu0 %v740, 8
      %v747 = vpop.permute.xlu0 %746
      %vm749 = vcmask 130112
      %750 = vst.msk [vmem:[#allocation2] sm:$0xff] %vm749, %v747
      %751 = vrot.lane.b32.xlu0 %v520, 112
      %v752 = vpop.permute.xlu0 %751
      %753 = vrot.lane.b32.xlu0 %v519, 112
      %v754 = vpop.permute.xlu0 %753
      %v756 = vsel %vm521, %v752, 0
      %v759 = vsel %vm521, %v754, 0
      %761 = vmatprep.subr.bf16.mxu0 0
      %762 = vmatpush1.bf16.xpose.msra.mxu0 %v759
      %763 = vmatprep.subr.bf16.mxu0 0
      %764 = vmatpush1.bf16.xpose.msra.mxu0 0
      %765 = vmatprep.subr.bf16.mxu0 0
      %766 = vmatpush1.bf16.xpose.msra.mxu0 0
      %767 = vmatprep.subr.bf16.mxu0 0
      %768 = vmatpush1.bf16.xpose.msra.mxu0 0
      %769 = vmatprep.subr.bf16.mxu0 0
      %770 = vmatpush1.bf16.xpose.msra.mxu0 0
      %771 = vmatprep.subr.bf16.mxu0 0
      %772 = vmatpush1.bf16.xpose.msra.mxu0 0
      %773 = vmatprep.subr.bf16.mxu0 0
      %774 = vmatpush1.bf16.xpose.msra.mxu0 0
      %775 = vmatprep.subr.bf16.mxu0 0
      %776 = vmatpush1.bf16.xpose.msra.mxu0 0
      %777 = vmatprep.subr.bf16.mxu0 0
      %778 = vmatpush1.bf16.xpose.msra.mxu0 0
      %779 = vmatprep.subr.bf16.mxu0 0
      %780 = vmatpush1.bf16.xpose.msra.mxu0 0
      %781 = vmatprep.subr.bf16.mxu0 0
      %782 = vmatpush1.bf16.xpose.msra.mxu0 0
      %783 = vmatprep.subr.bf16.mxu0 0
      %784 = vmatpush1.bf16.xpose.msra.mxu0 0
      %785 = vmatprep.subr.bf16.mxu0 0
      %786 = vmatpush1.bf16.xpose.msra.mxu0 0
      %787 = vmatprep.subr.bf16.mxu0 0
      %788 = vmatpush1.bf16.xpose.msra.mxu0 0
      %789 = vmatprep.subr.bf16.mxu0 0
      %790 = vmatpush1.bf16.xpose.msra.mxu0 0
      %791 = vmatprep.subr.bf16.mxu0 0
      %792 = vmatpush1.bf16.xpose.msra.mxu0 0
      %793 = vmatprep.mubr.bf16.mxu0 0
      %794 = vmatmul.mubr.bf16.gmra.mrb[0].mxu0 %v756
      %v795 = vpop.f32.mrb[0].mxu0
      %v796 = vadd.f32 0.0, %v795
      %v797 = vpop.f32.mrb[0].mxu0
      %v798 = vpop.f32.mrb[0].mxu0
      %v799 = vpop.f32.mrb[0].mxu0
      %800 = vdwg.mxu0
      %v801 = vsel %vm452, -1e+10, %v796
      %v802 = vsel %vm569, %v801, -inf
      %803 = vmax.xlane.f32.xlu0 %v802
      %v804 = vpop.xlane.xlu0 %803
      %v805 = vsub.f32 %v801, %v804
      %v806 = vmul.f32 %v805, 1.442695
      %v807 = vpow.pop %v806
      %v808 = vsel %vm569, %v807, 0.0
      %809 = vadd.xlane.f32.xlu0 %v808
      %v810 = vpop.xlane.xlu0 %809
      %v811 = vrcp.pop %v810
      %v812 = vmul.f32 %v807, %v811
      %v813 = vpack.c.bf16 %v812, %v812
      %814 = vrot.lane.b32.xlu0 %v519, 80
      %v815 = vpop.permute.xlu0 %814
      %v817 = vsel %vm569, %v813, 0
      %v820 = vsel %vm588, %v815, 0
      %822 = vmatprep.subr.bf16.mxu0 0
      %823 = vmatpush1.bf16.msra.mxu0 %v820
      %824 = vmatprep.subr.bf16.mxu0 0
      %825 = vmatpush1.bf16.msra.mxu0 0
      %826 = vmatprep.subr.bf16.mxu0 0
      %827 = vmatpush1.bf16.msra.mxu0 0
      %828 = vmatprep.subr.bf16.mxu0 0
      %829 = vmatpush1.bf16.msra.mxu0 0
      %830 = vmatprep.subr.bf16.mxu0 0
      %831 = vmatpush1.bf16.msra.mxu0 0
      %832 = vmatprep.subr.bf16.mxu0 0
      %833 = vmatpush1.bf16.msra.mxu0 0
      %834 = vmatprep.subr.bf16.mxu0 0
      %835 = vmatpush1.bf16.msra.mxu0 0
      %836 = vmatprep.subr.bf16.mxu0 0
      %837 = vmatpush1.bf16.msra.mxu0 0
      %838 = vmatprep.subr.bf16.mxu0 0
      %839 = vmatpush1.bf16.msra.mxu0 0
      %840 = vmatprep.subr.bf16.mxu0 0
      %841 = vmatpush1.bf16.msra.mxu0 0
      %842 = vmatprep.subr.bf16.mxu0 0
      %843 = vmatpush1.bf16.msra.mxu0 0
      %844 = vmatprep.subr.bf16.mxu0 0
      %845 = vmatpush1.bf16.msra.mxu0 0
      %846 = vmatprep.subr.bf16.mxu0 0
      %847 = vmatpush1.bf16.msra.mxu0 0
      %848 = vmatprep.subr.bf16.mxu0 0
      %849 = vmatpush1.bf16.msra.mxu0 0
      %850 = vmatprep.subr.bf16.mxu0 0
      %851 = vmatpush1.bf16.msra.mxu0 0
      %852 = vmatprep.subr.bf16.mxu0 0
      %853 = vmatpush1.bf16.msra.mxu0 0
      %854 = vmatprep.mubr.bf16.mxu0 0
      %855 = vmatmul.mubr.bf16.gmra.mrb[0].mxu0 %v817
      %v856 = vpop.f32.mrb[0].mxu0
      %v857 = vadd.f32 0.0, %v856
      %v858 = vpop.f32.mrb[0].mxu0
      %v859 = vpop.f32.mrb[0].mxu0
      %v860 = vpop.f32.mrb[0].mxu0
      %861 = vdwg.mxu0
      %863 = vrot.lane.b32.xlu0 %v857, 16
      %v864 = vpop.permute.xlu0 %863
      %vm866 = vcmask 195712
      %867 = vst.msk [vmem:[#allocation2] sm:$0xff] %vm866, %v864
      %868 = vrot.lane.b32.xlu0 %v520, 104
      %v869 = vpop.permute.xlu0 %868
      %870 = vrot.lane.b32.xlu0 %v519, 104
      %v871 = vpop.permute.xlu0 %870
      %v873 = vsel %vm521, %v869, 0
      %v876 = vsel %vm521, %v871, 0
      %878 = vmatprep.subr.bf16.mxu0 0
      %879 = vmatpush1.bf16.xpose.msra.mxu0 %v876
      %880 = vmatprep.subr.bf16.mxu0 0
      %881 = vmatpush1.bf16.xpose.msra.mxu0 0
      %882 = vmatprep.subr.bf16.mxu0 0
      %883 = vmatpush1.bf16.xpose.msra.mxu0 0
      %884 = vmatprep.subr.bf16.mxu0 0
      %885 = vmatpush1.bf16.xpose.msra.mxu0 0
      %886 = vmatprep.subr.bf16.mxu0 0
      %887 = vmatpush1.bf16.xpose.msra.mxu0 0
      %888 = vmatprep.subr.bf16.mxu0 0
      %889 = vmatpush1.bf16.xpose.msra.mxu0 0
      %890 = vmatprep.subr.bf16.mxu0 0
      %891 = vmatpush1.bf16.xpose.msra.mxu0 0
      %892 = vmatprep.subr.bf16.mxu0 0
      %893 = vmatpush1.bf16.xpose.msra.mxu0 0
      %894 = vmatprep.subr.bf16.mxu0 0
      %895 = vmatpush1.bf16.xpose.msra.mxu0 0
      %896 = vmatprep.subr.bf16.mxu0 0
      %897 = vmatpush1.bf16.xpose.msra.mxu0 0
      %898 = vmatprep.subr.bf16.mxu0 0
      %899 = vmatpush1.bf16.xpose.msra.mxu0 0
      %900 = vmatprep.subr.bf16.mxu0 0
      %901 = vmatpush1.bf16.xpose.msra.mxu0 0
      %902 = vmatprep.subr.bf16.mxu0 0
      %903 = vmatpush1.bf16.xpose.msra.mxu0 0
      %904 = vmatprep.subr.bf16.mxu0 0
      %905 = vmatpush1.bf16.xpose.msra.mxu0 0
      %906 = vmatprep.subr.bf16.mxu0 0
      %907 = vmatpush1.bf16.xpose.msra.mxu0 0
      %908 = vmatprep.subr.bf16.mxu0 0
      %909 = vmatpush1.bf16.xpose.msra.mxu0 0
      %910 = vmatprep.mubr.bf16.mxu0 0
      %911 = vmatmul.mubr.bf16.gmra.mrb[0].mxu0 %v873
      %v912 = vpop.f32.mrb[0].mxu0
      %v913 = vadd.f32 0.0, %v912
      %v914 = vpop.f32.mrb[0].mxu0
      %v915 = vpop.f32.mrb[0].mxu0
      %v916 = vpop.f32.mrb[0].mxu0
      %917 = vdwg.mxu0
      %v918 = vsel %vm452, -1e+10, %v913
      %v919 = vsel %vm569, %v918, -inf
      %920 = vmax.xlane.f32.xlu0 %v919
      %v921 = vpop.xlane.xlu0 %920
      %v922 = vsub.f32 %v918, %v921
      %v923 = vmul.f32 %v922, 1.442695
      %v924 = vpow.pop %v923
      %v925 = vsel %vm569, %v924, 0.0
      %926 = vadd.xlane.f32.xlu0 %v925
      %v927 = vpop.xlane.xlu0 %926
      %v928 = vrcp.pop %v927
      %v929 = vmul.f32 %v924, %v928
      %v930 = vpack.c.bf16 %v929, %v929
      %931 = vrot.lane.b32.xlu0 %v519, 72
      %v932 = vpop.permute.xlu0 %931
      %v934 = vsel %vm569, %v930, 0
      %v937 = vsel %vm588, %v932, 0
      %939 = vmatprep.subr.bf16.mxu0 0
      %940 = vmatpush1.bf16.msra.mxu0 %v937
      %941 = vmatprep.subr.bf16.mxu0 0
      %942 = vmatpush1.bf16.msra.mxu0 0
      %943 = vmatprep.subr.bf16.mxu0 0
      %944 = vmatpush1.bf16.msra.mxu0 0
      %945 = vmatprep.subr.bf16.mxu0 0
      %946 = vmatpush1.bf16.msra.mxu0 0
      %947 = vmatprep.subr.bf16.mxu0 0
      %948 = vmatpush1.bf16.msra.mxu0 0
      %949 = vmatprep.subr.bf16.mxu0 0
      %950 = vmatpush1.bf16.msra.mxu0 0
      %951 = vmatprep.subr.bf16.mxu0 0
      %952 = vmatpush1.bf16.msra.mxu0 0
      %953 = vmatprep.subr.bf16.mxu0 0
      %954 = vmatpush1.bf16.msra.mxu0 0
      %955 = vmatprep.subr.bf16.mxu0 0
      %956 = vmatpush1.bf16.msra.mxu0 0
      %957 = vmatprep.subr.bf16.mxu0 0
      %958 = vmatpush1.bf16.msra.mxu0 0
      %959 = vmatprep.subr.bf16.mxu0 0
      %960 = vmatpush1.bf16.msra.mxu0 0
      %961 = vmatprep.subr.bf16.mxu0 0
      %962 = vmatpush1.bf16.msra.mxu0 0
      %963 = vmatprep.subr.bf16.mxu0 0
      %964 = vmatpush1.bf16.msra.mxu0 0
      %965 = vmatprep.subr.bf16.mxu0 0
      %966 = vmatpush1.bf16.msra.mxu0 0
      %967 = vmatprep.subr.bf16.mxu0 0
      %968 = vmatpush1.bf16.msra.mxu0 0
      %969 = vmatprep.subr.bf16.mxu0 0
      %970 = vmatpush1.bf16.msra.mxu0 0
      %971 = vmatprep.mubr.bf16.mxu0 0
      %972 = vmatmul.mubr.bf16.gmra.mrb[0].mxu0 %v934
      %v973 = vpop.f32.mrb[0].mxu0
      %v974 = vadd.f32 0.0, %v973
      %v975 = vpop.f32.mrb[0].mxu0
      %v976 = vpop.f32.mrb[0].mxu0
      %v977 = vpop.f32.mrb[0].mxu0
      %978 = vdwg.mxu0
      %980 = vrot.lane.b32.xlu0 %v974, 24
      %v981 = vpop.permute.xlu0 %980
      %vm983 = vcmask 261312
      %984 = vst.msk [vmem:[#allocation2] sm:$0xff] %vm983, %v981
      %v985 = vld [vmem:[#allocation2] sm:$0xff]
      %v986 = vadd.f32 %v444, %v985
      %v987 = vpack.c.bf16 %v986, %v986
      %v992 = vunpack.c.l.b16 %v457
      %v993 = vunpack.c.l.b16 %v458
      %v994 = vunpack.c.l.b16 %v459
      %v995 = vunpack.c.l.b16 %v460
      %v996 = vpack.c.b16 %v993, %v992
      %v997 = vpack.c.b16 %v995, %v994
      %1000 = vrot.lane.b32.xlu0 %v466, 64
      %v1001 = vpop.permute.xlu0 %1000
      %vm1003 = vcmask 261120
      %v1005 = vsel %vm1003, %v987, 0
      %1007 = vmatprep.subr.bf16.mxu0 0
      %1008 = vmatpush1.bf16.msra.mxu0 %v996
      %1009 = vmatprep.subr.bf16.mxu0 0
      %1010 = vmatpush1.bf16.msra.mxu0 %v997
      %1011 = vmatprep.subr.bf16.mxu0 0
      %1012 = vmatpush1.bf16.msra.mxu0 0
      %1013 = vmatprep.subr.bf16.mxu0 0
      %1014 = vmatpush1.bf16.msra.mxu0 0
      %1015 = vmatprep.subr.bf16.mxu0 0
      %1016 = vmatpush1.bf16.msra.mxu0 0
      %1017 = vmatprep.subr.bf16.mxu0 0
      %1018 = vmatpush1.bf16.msra.mxu0 0
      %1019 = vmatprep.subr.bf16.mxu0 0
      %1020 = vmatpush1.bf16.msra.mxu0 0
      %1021 = vmatprep.subr.bf16.mxu0 0
      %1022 = vmatpush1.bf16.msra.mxu0 0
      %1023 = vmatprep.subr.bf16.mxu0 0
      %1024 = vmatpush1.bf16.msra.mxu0 0
      %1025 = vmatprep.subr.bf16.mxu0 0
      %1026 = vmatpush1.bf16.msra.mxu0 0
      %1027 = vmatprep.subr.bf16.mxu0 0
      %1028 = vmatpush1.bf16.msra.mxu0 0
      %1029 = vmatprep.subr.bf16.mxu0 0
      %1030 = vmatpush1.bf16.msra.mxu0 0
      %1031 = vmatprep.subr.bf16.mxu0 0
      %1032 = vmatpush1.bf16.msra.mxu0 0
      %1033 = vmatprep.subr.bf16.mxu0 0
      %1034 = vmatpush1.bf16.msra.mxu0 0
      %1035 = vmatprep.subr.bf16.mxu0 0
      %1036 = vmatpush1.bf16.msra.mxu0 0
      %1037 = vmatprep.subr.bf16.mxu0 0
      %1038 = vmatpush1.bf16.msra.mxu0 0
      %1039 = vmatprep.mubr.bf16.mxu0 0
      %1040 = vmatmul.mubr.bf16.gmra.mrb[0].mxu0 %v1005
      %v1041 = vpop.f32.mrb[0].mxu0
      %v1042 = vadd.f32 %v1001, %v1041
      %v1043 = vpop.f32.mrb[0].mxu0
      %v1044 = vpop.f32.mrb[0].mxu0
      %v1045 = vpop.f32.mrb[0].mxu0
      %1046 = vdwg.mxu0
      %v1047 = vmax.f32 %v1042, 0.0
      %v1048 = vadd.f32 %v986, %v1047
      %v1049 = vld [vmem:[%s422] sm:$0xff]
      %v1050 = vld [vmem:[%s422 + $0x8] sm:$0xf]
      %v1051 = vpack.c.bf16 %v1050, %v1049
      %v1052 = vld [vmem:[%s6] sm:$0xf]
      %v1053 = vld [vmem:[%s6 + $0x4] sm:$0xf]
      %v1055 = vlaneseq
      %v1056 = vshrl.u32 %v1055, 7
      %v1057 = vsub.s32 0, %v1056
      %v1058 = vrot.slane %v443, %v1057
      %v1062 = vunpack.c.l.b16 %v1052
      %v1063 = vunpack.c.l.b16 %v1053
      %v1064 = vpack.c.b16 %v1063, %v1062
      %v1067 = vsel %vm474, %v1051, 0
      %1069 = vmatprep.subr.bf16.mxu0 0
      %1070 = vmatpush1.bf16.msra.mxu0 %v1064
      %1071 = vmatprep.subr.bf16.mxu0 0
      %1072 = vmatpush1.bf16.msra.mxu0 0
      %1073 = vmatprep.subr.bf16.mxu0 0
      %1074 = vmatpush1.bf16.msra.mxu0 0
      %1075 = vmatprep.subr.bf16.mxu0 0
      %1076 = vmatpush1.bf16.msra.mxu0 0
      %1077 = vmatprep.subr.bf16.mxu0 0
      %1078 = vmatpush1.bf16.msra.mxu0 0
      %1079 = vmatprep.subr.bf16.mxu0 0
      %1080 = vmatpush1.bf16.msra.mxu0 0
      %1081 = vmatprep.subr.bf16.mxu0 0
      %1082 = vmatpush1.bf16.msra.mxu0 0
      %1083 = vmatprep.subr.bf16.mxu0 0
      %1084 = vmatpush1.bf16.msra.mxu0 0
      %1085 = vmatprep.subr.bf16.mxu0 0
      %1086 = vmatpush1.bf16.msra.mxu0 0
      %1087 = vmatprep.subr.bf16.mxu0 0
      %1088 = vmatpush1.bf16.msra.mxu0 0
      %1089 = vmatprep.subr.bf16.mxu0 0
      %1090 = vmatpush1.bf16.msra.mxu0 0
      %1091 = vmatprep.subr.bf16.mxu0 0
      %1092 = vmatpush1.bf16.msra.mxu0 0
      %1093 = vmatprep.subr.bf16.mxu0 0
      %1094 = vmatpush1.bf16.msra.mxu0 0
      %1095 = vmatprep.subr.bf16.mxu0 0
      %1096 = vmatpush1.bf16.msra.mxu0 0
      %1097 = vmatprep.subr.bf16.mxu0 0
      %1098 = vmatpush1.bf16.msra.mxu0 0
      %1099 = vmatprep.subr.bf16.mxu0 0
      %1100 = vmatpush1.bf16.msra.mxu0 0
      %1101 = vmatprep.mubr.bf16.mxu0 0
      %1102 = vmatmul.mubr.bf16.gmra.mrb[0].mxu0 %v1067
      %v1103 = vpop.f32.mrb[0].mxu0
      %v1104 = vadd.f32 %v1058, %v1103
      %v1105 = vpop.f32.mrb[0].mxu0
      %v1106 = vpop.f32.mrb[0].mxu0
      %v1107 = vadd.f32 %v1058, %v1106
      %v1108 = vpop.f32.mrb[0].mxu0
      %1109 = vdwg.mxu0
      %v1110 = vld [vmem:[%s435] sm:$0xff]
      %v1111 = vld [vmem:[%s435 + $0x8] sm:$0xf]
      %1113 = vset.pattern.permute.xlu0 0
      %1114 = vperm.xlu0 %1113, %v1110
      %v1115 = vpop.permute.xlu0 %1114
      %1118 = vset.pattern.permute.xlu0 0
      %1119 = vperm.xlu0 %1118, %v1111
      %v1120 = vpop.permute.xlu0 %1119
      %vm1122 = vcmp.eq.f32.partialorder %v1115, 0.0
      %vm1123 = vcmp.eq.f32.partialorder %v1120, 0.0
      %v1124 = vld [vmem:[%s7] sm:$0xf]
      %v1125 = vld [vmem:[%s7 + $0x4] sm:$0xf]
      %v1126 = vld [vmem:[%s7 + $0x8] sm:$0xf]
      %v1127 = vld [vmem:[%s7 + $0xc] sm:$0xf]
      %s1128 = scalar_lea.vmem %s8, 16
      %v1129 = vld [vmem:[%s1128] sm:$0xf]
      %v1130 = vld [vmem:[%s1128 + $0x4] sm:$0xf]
      %v1131 = vld [vmem:[%s1128 + $0x8] sm:$0xf]
      %v1132 = vld [vmem:[%s1128 + $0xc] sm:$0xf]
      %v1133 = vpack.c.bf16 %v1048, %v1048
      %v1138 = vunpack.c.l.b16 %v1124
      %v1139 = vunpack.c.l.b16 %v1125
      %v1140 = vunpack.c.l.b16 %v1126
      %v1141 = vunpack.c.l.b16 %v1127
      %v1142 = vpack.c.b16 %v1139, %v1138
      %v1143 = vpack.c.b16 %v1141, %v1140
      %1146 = vrot.lane.b32.xlu0 %v1058, 96
      %v1147 = vpop.permute.xlu0 %1146
      %v1150 = vsel %vm1003, %v1133, 0
      %1152 = vmatprep.subr.bf16.mxu0 0
      %1153 = vmatpush1.bf16.msra.mxu0 %v1142
      %1154 = vmatprep.subr.bf16.mxu0 0
      %1155 = vmatpush1.bf16.msra.mxu0 %v1143
      %1156 = vmatprep.subr.bf16.mxu0 0
      %1157 = vmatpush1.bf16.msra.mxu0 0
      %1158 = vmatprep.subr.bf16.mxu0 0
      %1159 = vmatpush1.bf16.msra.mxu0 0
      %1160 = vmatprep.subr.bf16.mxu0 0
      %1161 = vmatpush1.bf16.msra.mxu0 0
      %1162 = vmatprep.subr.bf16.mxu0 0
      %1163 = vmatpush1.bf16.msra.mxu0 0
      %1164 = vmatprep.subr.bf16.mxu0 0
      %1165 = vmatpush1.bf16.msra.mxu0 0
      %1166 = vmatprep.subr.bf16.mxu0 0
      %1167 = vmatpush1.bf16.msra.mxu0 0
      %1168 = vmatprep.subr.bf16.mxu0 0
      %1169 = vmatpush1.bf16.msra.mxu0 0
      %1170 = vmatprep.subr.bf16.mxu0 0
      %1171 = vmatpush1.bf16.msra.mxu0 0
      %1172 = vmatprep.subr.bf16.mxu0 0
      %1173 = vmatpush1.bf16.msra.mxu0 0
      %1174 = vmatprep.subr.bf16.mxu0 0
      %1175 = vmatpush1.bf16.msra.mxu0 0
      %1176 = vmatprep.subr.bf16.mxu0 0
      %1177 = vmatpush1.bf16.msra.mxu0 0
      %1178 = vmatprep.subr.bf16.mxu0 0
      %1179 = vmatpush1.bf16.msra.mxu0 0
      %1180 = vmatprep.subr.bf16.mxu0 0
      %1181 = vmatpush1.bf16.msra.mxu0 0
      %1182 = vmatprep.subr.bf16.mxu0 0
      %1183 = vmatpush1.bf16.msra.mxu0 0
      %1184 = vmatprep.mubr.bf16.mxu0 0
      %1185 = vmatmul.mubr.bf16.gmra.mrb[0].mxu0 %v1150
      %v1186 = vpop.f32.mrb[0].mxu0
      %v1187 = vadd.f32 %v1147, %v1186
      %v1188 = vpop.f32.mrb[0].mxu0
      %v1189 = vpop.f32.mrb[0].mxu0
      %v1190 = vpop.f32.mrb[0].mxu0
      %1191 = vdwg.mxu0
      %v1192 = vpack.c.bf16 %v1187, %v1187
      %v1193 = vpack.c.bf16 %v1107, %v1104
      %v1195 = vsel %vm521, %v1193, 0
      %v1198 = vsel %vm521, %v1192, 0
      %1200 = vmatprep.subr.bf16.mxu0 0
      %1201 = vmatpush1.bf16.xpose.msra.mxu0 %v1198
      %1202 = vmatprep.subr.bf16.mxu0 0
      %1203 = vmatpush1.bf16.xpose.msra.mxu0 0
      %1204 = vmatprep.subr.bf16.mxu0 0
      %1205 = vmatpush1.bf16.xpose.msra.mxu0 0
      %1206 = vmatprep.subr.bf16.mxu0 0
      %1207 = vmatpush1.bf16.xpose.msra.mxu0 0
      %1208 = vmatprep.subr.bf16.mxu0 0
      %1209 = vmatpush1.bf16.xpose.msra.mxu0 0
      %1210 = vmatprep.subr.bf16.mxu0 0
      %1211 = vmatpush1.bf16.xpose.msra.mxu0 0
      %1212 = vmatprep.subr.bf16.mxu0 0
      %1213 = vmatpush1.bf16.xpose.msra.mxu0 0
      %1214 = vmatprep.subr.bf16.mxu0 0
      %1215 = vmatpush1.bf16.xpose.msra.mxu0 0
      %1216 = vmatprep.subr.bf16.mxu0 0
      %1217 = vmatpush1.bf16.xpose.msra.mxu0 0
      %1218 = vmatprep.subr.bf16.mxu0 0
      %1219 = vmatpush1.bf16.xpose.msra.mxu0 0
      %1220 = vmatprep.subr.bf16.mxu0 0
      %1221 = vmatpush1.bf16.xpose.msra.mxu0 0
      %1222 = vmatprep.subr.bf16.mxu0 0
      %1223 = vmatpush1.bf16.xpose.msra.mxu0 0
      %1224 = vmatprep.subr.bf16.mxu0 0
      %1225 = vmatpush1.bf16.xpose.msra.mxu0 0
      %1226 = vmatprep.subr.bf16.mxu0 0
      %1227 = vmatpush1.bf16.xpose.msra.mxu0 0
      %1228 = vmatprep.subr.bf16.mxu0 0
      %1229 = vmatpush1.bf16.xpose.msra.mxu0 0
      %1230 = vmatprep.subr.bf16.mxu0 0
      %1231 = vmatpush1.bf16.xpose.msra.mxu0 0
      %1232 = vmatprep.mubr.bf16.mxu0 0
      %1233 = vmatmul.mubr.bf16.gmra.mrb[0].mxu0 %v1195
      %v1234 = vpop.f32.mrb[0].mxu0
      %v1235 = vadd.f32 0.0, %v1234
      %v1236 = vpop.f32.mrb[0].mxu0
      %v1237 = vpop.f32.mrb[0].mxu0
      %v1238 = vadd.f32 0.0, %v1237
      %v1239 = vpop.f32.mrb[0].mxu0
      %1240 = vdwg.mxu0
      %v1241 = vsel %vm1122, -1e+10, %v1235
      %v1242 = vsel %vm1123, -1e+10, %v1238
      %v1243 = vsel %vm521, %v1241, -inf
      %1244 = vmax.xlane.f32.xlu0 %v1243
      %v1245 = vpop.xlane.xlu0 %1244
      %vm1246 = vcmask 60416
      %v1247 = vsel %vm1246, %v1242, -inf
      %1248 = vmax.xlane.f32.xlu0 %v1247
      %v1249 = vpop.xlane.xlu0 %1248
      %v1250 = vsub.f32 %v1241, %v1245
      %v1251 = vsub.f32 %v1242, %v1249
      %v1252 = vmul.f32 %v1250, 1.442695
      %v1253 = vpow.pop %v1252
      %v1254 = vmul.f32 %v1251, 1.442695
      %v1255 = vpow.pop %v1254
      %v1256 = vsel %vm521, %v1253, 0.0
      %1257 = vadd.xlane.f32.xlu0 %v1256
      %v1258 = vpop.xlane.xlu0 %1257
      %v1259 = vsel %vm1246, %v1255, 0.0
      %1260 = vadd.xlane.f32.xlu0 %v1259
      %v1261 = vpop.xlane.xlu0 %1260
      %v1262 = vrcp.pop %v1258
      %v1263 = vrcp.pop %v1261
      %v1264 = vmul.f32 %v1253, %v1262
      %v1265 = vmul.f32 %v1255, %v1263
      %v1266 = vpack.c.bf16 %v1265, %v1264
      %1268 = vrot.lane.b32.xlu0 %v1192, 96
      %v1269 = vpop.permute.xlu0 %1268
      %v1271 = vsel %vm521, %v1266, 0
      %vm1273 = vcmask 1043456
      %v1275 = vsel %vm1273, %v1269, 0
      %1277 = vmatprep.subr.bf16.mxu0 0
      %1278 = vmatpush1.bf16.msra.mxu0 %v1275
      %1279 = vmatprep.subr.bf16.mxu0 0
      %1280 = vmatpush1.bf16.msra.mxu0 0
      %1281 = vmatprep.subr.bf16.mxu0 0
      %1282 = vmatpush1.bf16.msra.mxu0 0
      %1283 = vmatprep.subr.bf16.mxu0 0
      %1284 = vmatpush1.bf16.msra.mxu0 0
      %1285 = vmatprep.subr.bf16.mxu0 0
      %1286 = vmatpush1.bf16.msra.mxu0 0
      %1287 = vmatprep.subr.bf16.mxu0 0
      %1288 = vmatpush1.bf16.msra.mxu0 0
      %1289 = vmatprep.subr.bf16.mxu0 0
      %1290 = vmatpush1.bf16.msra.mxu0 0
      %1291 = vmatprep.subr.bf16.mxu0 0
      %1292 = vmatpush1.bf16.msra.mxu0 0
      %1293 = vmatprep.subr.bf16.mxu0 0
      %1294 = vmatpush1.bf16.msra.mxu0 0
      %1295 = vmatprep.subr.bf16.mxu0 0
      %1296 = vmatpush1.bf16.msra.mxu0 0
      %1297 = vmatprep.subr.bf16.mxu0 0
      %1298 = vmatpush1.bf16.msra.mxu0 0
      %1299 = vmatprep.subr.bf16.mxu0 0
      %1300 = vmatpush1.bf16.msra.mxu0 0
      %1301 = vmatprep.subr.bf16.mxu0 0
      %1302 = vmatpush1.bf16.msra.mxu0 0
      %1303 = vmatprep.subr.bf16.mxu0 0
      %1304 = vmatpush1.bf16.msra.mxu0 0
      %1305 = vmatprep.subr.bf16.mxu0 0
      %1306 = vmatpush1.bf16.msra.mxu0 0
      %1307 = vmatprep.subr.bf16.mxu0 0
      %1308 = vmatpush1.bf16.msra.mxu0 0
      %1309 = vmatprep.mubr.bf16.mxu0 0
      %1310 = vmatmul.mubr.bf16.gmra.mrb[0].mxu0 %v1271
      %v1311 = vpop.f32.mrb[0].mxu0
      %v1312 = vadd.f32 0.0, %v1311
      %v1313 = vpop.f32.mrb[0].mxu0
      %v1314 = vpop.f32.mrb[0].mxu0
      %v1315 = vadd.f32 0.0, %v1314
      %v1316 = vpop.f32.mrb[0].mxu0
      %1317 = vdwg.mxu0
      %1318 = vst.msk [vmem:[#allocation3] sm:$0xff] %vm521, %v1312
      %1319 = vst.msk [vmem:[#allocation3 + $0x8] sm:$0xf] %vm1246, %v1315
      %1321 = vrot.lane.b32.xlu0 %v1193, 120
      %v1322 = vpop.permute.xlu0 %1321
      %1323 = vrot.lane.b32.xlu0 %v1192, 120
      %v1324 = vpop.permute.xlu0 %1323
      %v1326 = vsel %vm521, %v1322, 0
      %v1329 = vsel %vm521, %v1324, 0
      %1331 = vmatprep.subr.bf16.mxu0 0
      %1332 = vmatpush1.bf16.xpose.msra.mxu0 %v1329
      %1333 = vmatprep.subr.bf16.mxu0 0
      %1334 = vmatpush1.bf16.xpose.msra.mxu0 0
      %1335 = vmatprep.subr.bf16.mxu0 0
      %1336 = vmatpush1.bf16.xpose.msra.mxu0 0
      %1337 = vmatprep.subr.bf16.mxu0 0
      %1338 = vmatpush1.bf16.xpose.msra.mxu0 0
      %1339 = vmatprep.subr.bf16.mxu0 0
      %1340 = vmatpush1.bf16.xpose.msra.mxu0 0
      %1341 = vmatprep.subr.bf16.mxu0 0
      %1342 = vmatpush1.bf16.xpose.msra.mxu0 0
      %1343 = vmatprep.subr.bf16.mxu0 0
      %1344 = vmatpush1.bf16.xpose.msra.mxu0 0
      %1345 = vmatprep.subr.bf16.mxu0 0
      %1346 = vmatpush1.bf16.xpose.msra.mxu0 0
      %1347 = vmatprep.subr.bf16.mxu0 0
      %1348 = vmatpush1.bf16.xpose.msra.mxu0 0
      %1349 = vmatprep.subr.bf16.mxu0 0
      %1350 = vmatpush1.bf16.xpose.msra.mxu0 0
      %1351 = vmatprep.subr.bf16.mxu0 0
      %1352 = vmatpush1.bf16.xpose.msra.mxu0 0
      %1353 = vmatprep.subr.bf16.mxu0 0
      %1354 = vmatpush1.bf16.xpose.msra.mxu0 0
      %1355 = vmatprep.subr.bf16.mxu0 0
      %1356 = vmatpush1.bf16.xpose.msra.mxu0 0
      %1357 = vmatprep.subr.bf16.mxu0 0
      %1358 = vmatpush1.bf16.xpose.msra.mxu0 0
      %1359 = vmatprep.subr.bf16.mxu0 0
      %1360 = vmatpush1.bf16.xpose.msra.mxu0 0
      %1361 = vmatprep.subr.bf16.mxu0 0
      %1362 = vmatpush1.bf16.xpose.msra.mxu0 0
      %1363 = vmatprep.mubr.bf16.mxu0 0
      %1364 = vmatmul.mubr.bf16.gmra.mrb[0].mxu0 %v1326
      %v1365 = vpop.f32.mrb[0].mxu0
      %v1366 = vadd.f32 0.0, %v1365
      %v1367 = vpop.f32.mrb[0].mxu0
      %v1368 = vpop.f32.mrb[0].mxu0
      %v1369 = vadd.f32 0.0, %v1368
      %v1370 = vpop.f32.mrb[0].mxu0
      %1371 = vdwg.mxu0
      %v1372 = vsel %vm1122, -1e+10, %v1366
      %v1373 = vsel %vm1123, -1e+10, %v1369
      %v1374 = vsel %vm521, %v1372, -inf
      %1375 = vmax.xlane.f32.xlu0 %v1374
      %v1376 = vpop.xlane.xlu0 %1375
      %v1377 = vsel %vm1246, %v1373, -inf
      %1378 = vmax.xlane.f32.xlu0 %v1377
      %v1379 = vpop.xlane.xlu0 %1378
      %v1380 = vsub.f32 %v1372, %v1376
      %v1381 = vsub.f32 %v1373, %v1379
      %v1382 = vmul.f32 %v1380, 1.442695
      %v1383 = vpow.pop %v1382
      %v1384 = vmul.f32 %v1381, 1.442695
      %v1385 = vpow.pop %v1384
      %v1386 = vsel %vm521, %v1383, 0.0
      %1387 = vadd.xlane.f32.xlu0 %v1386
      %v1388 = vpop.xlane.xlu0 %1387
      %v1389 = vsel %vm1246, %v1385, 0.0
      %1390 = vadd.xlane.f32.xlu0 %v1389
      %v1391 = vpop.xlane.xlu0 %1390
      %v1392 = vrcp.pop %v1388
      %v1393 = vrcp.pop %v1391
      %v1394 = vmul.f32 %v1383, %v1392
      %v1395 = vmul.f32 %v1385, %v1393
      %v1396 = vpack.c.bf16 %v1395, %v1394
      %1397 = vrot.lane.b32.xlu0 %v1192, 88
      %v1398 = vpop.permute.xlu0 %1397
      %v1400 = vsel %vm521, %v1396, 0
      %v1403 = vsel %vm1273, %v1398, 0
      %1405 = vmatprep.subr.bf16.mxu0 0
      %1406 = vmatpush1.bf16.msra.mxu0 %v1403
      %1407 = vmatprep.subr.bf16.mxu0 0
      %1408 = vmatpush1.bf16.msra.mxu0 0
      %1409 = vmatprep.subr.bf16.mxu0 0
      %1410 = vmatpush1.bf16.msra.mxu0 0
      %1411 = vmatprep.subr.bf16.mxu0 0
      %1412 = vmatpush1.bf16.msra.mxu0 0
      %1413 = vmatprep.subr.bf16.mxu0 0
      %1414 = vmatpush1.bf16.msra.mxu0 0
      %1415 = vmatprep.subr.bf16.mxu0 0
      %1416 = vmatpush1.bf16.msra.mxu0 0
      %1417 = vmatprep.subr.bf16.mxu0 0
      %1418 = vmatpush1.bf16.msra.mxu0 0
      %1419 = vmatprep.subr.bf16.mxu0 0
      %1420 = vmatpush1.bf16.msra.mxu0 0
      %1421 = vmatprep.subr.bf16.mxu0 0
      %1422 = vmatpush1.bf16.msra.mxu0 0
      %1423 = vmatprep.subr.bf16.mxu0 0
      %1424 = vmatpush1.bf16.msra.mxu0 0
      %1425 = vmatprep.subr.bf16.mxu0 0
      %1426 = vmatpush1.bf16.msra.mxu0 0
      %1427 = vmatprep.subr.bf16.mxu0 0
      %1428 = vmatpush1.bf16.msra.mxu0 0
      %1429 = vmatprep.subr.bf16.mxu0 0
      %1430 = vmatpush1.bf16.msra.mxu0 0
      %1431 = vmatprep.subr.bf16.mxu0 0
      %1432 = vmatpush1.bf16.msra.mxu0 0
      %1433 = vmatprep.subr.bf16.mxu0 0
      %1434 = vmatpush1.bf16.msra.mxu0 0
      %1435 = vmatprep.subr.bf16.mxu0 0
      %1436 = vmatpush1.bf16.msra.mxu0 0
      %1437 = vmatprep.mubr.bf16.mxu0 0
      %1438 = vmatmul.mubr.bf16.gmra.mrb[0].mxu0 %v1400
      %v1439 = vpop.f32.mrb[0].mxu0
      %v1440 = vadd.f32 0.0, %v1439
      %v1441 = vpop.f32.mrb[0].mxu0
      %v1442 = vpop.f32.mrb[0].mxu0
      %v1443 = vadd.f32 0.0, %v1442
      %v1444 = vpop.f32.mrb[0].mxu0
      %1445 = vdwg.mxu0
      %1448 = vrot.lane.b32.xlu0 %v1440, 8
      %v1449 = vpop.permute.xlu0 %1448
      %1450 = vrot.lane.b32.xlu0 %v1443, 8
      %v1451 = vpop.permute.xlu0 %1450
      %1454 = vst.msk [vmem:[#allocation3] sm:$0xff] %vm749, %v1449
      %vm1455 = vcmask 126016
      %1456 = vst.msk [vmem:[#allocation3 + $0x8] sm:$0xf] %vm1455, %v1451
      %1457 = vrot.lane.b32.xlu0 %v1193, 112
      %v1458 = vpop.permute.xlu0 %1457
      %1459 = vrot.lane.b32.xlu0 %v1192, 112
      %v1460 = vpop.permute.xlu0 %1459
      %v1462 = vsel %vm521, %v1458, 0
      %v1465 = vsel %vm521, %v1460, 0
      %1467 = vmatprep.subr.bf16.mxu0 0
      %1468 = vmatpush1.bf16.xpose.msra.mxu0 %v1465
      %1469 = vmatprep.subr.bf16.mxu0 0
      %1470 = vmatpush1.bf16.xpose.msra.mxu0 0
      %1471 = vmatprep.subr.bf16.mxu0 0
      %1472 = vmatpush1.bf16.xpose.msra.mxu0 0
      %1473 = vmatprep.subr.bf16.mxu0 0
      %1474 = vmatpush1.bf16.xpose.msra.mxu0 0
      %1475 = vmatprep.subr.bf16.mxu0 0
      %1476 = vmatpush1.bf16.xpose.msra.mxu0 0
      %1477 = vmatprep.subr.bf16.mxu0 0
      %1478 = vmatpush1.bf16.xpose.msra.mxu0 0
      %1479 = vmatprep.subr.bf16.mxu0 0
      %1480 = vmatpush1.bf16.xpose.msra.mxu0 0
      %1481 = vmatprep.subr.bf16.mxu0 0
      %1482 = vmatpush1.bf16.xpose.msra.mxu0 0
      %1483 = vmatprep.subr.bf16.mxu0 0
      %1484 = vmatpush1.bf16.xpose.msra.mxu0 0
      %1485 = vmatprep.subr.bf16.mxu0 0
      %1486 = vmatpush1.bf16.xpose.msra.mxu0 0
      %1487 = vmatprep.subr.bf16.mxu0 0
      %1488 = vmatpush1.bf16.xpose.msra.mxu0 0
      %1489 = vmatprep.subr.bf16.mxu0 0
      %1490 = vmatpush1.bf16.xpose.msra.mxu0 0
      %1491 = vmatprep.subr.bf16.mxu0 0
      %1492 = vmatpush1.bf16.xpose.msra.mxu0 0
      %1493 = vmatprep.subr.bf16.mxu0 0
      %1494 = vmatpush1.bf16.xpose.msra.mxu0 0
      %1495 = vmatprep.subr.bf16.mxu0 0
      %1496 = vmatpush1.bf16.xpose.msra.mxu0 0
      %1497 = vmatprep.subr.bf16.mxu0 0
      %1498 = vmatpush1.bf16.xpose.msra.mxu0 0
      %1499 = vmatprep.mubr.bf16.mxu0 0
      %1500 = vmatmul.mubr.bf16.gmra.mrb[0].mxu0 %v1462
      %v1501 = vpop.f32.mrb[0].mxu0
      %v1502 = vadd.f32 0.0, %v1501
      %v1503 = vpop.f32.mrb[0].mxu0
      %v1504 = vpop.f32.mrb[0].mxu0
      %v1505 = vadd.f32 0.0, %v1504
      %v1506 = vpop.f32.mrb[0].mxu0
      %1507 = vdwg.mxu0
      %v1508 = vsel %vm1122, -1e+10, %v1502
      %v1509 = vsel %vm1123, -1e+10, %v1505
      %v1510 = vsel %vm521, %v1508, -inf
      %1511 = vmax.xlane.f32.xlu0 %v1510
      %v1512 = vpop.xlane.xlu0 %1511
      %v1513 = vsel %vm1246, %v1509, -inf
      %1514 = vmax.xlane.f32.xlu0 %v1513
      %v1515 = vpop.xlane.xlu0 %1514
      %v1516 = vsub.f32 %v1508, %v1512
      %v1517 = vsub.f32 %v1509, %v1515
      %v1518 = vmul.f32 %v1516, 1.442695
      %v1519 = vpow.pop %v1518
      %v1520 = vmul.f32 %v1517, 1.442695
      %v1521 = vpow.pop %v1520
      %v1522 = vsel %vm521, %v1519, 0.0
      %1523 = vadd.xlane.f32.xlu0 %v1522
      %v1524 = vpop.xlane.xlu0 %1523
      %v1525 = vsel %vm1246, %v1521, 0.0
      %1526 = vadd.xlane.f32.xlu0 %v1525
      %v1527 = vpop.xlane.xlu0 %1526
      %v1528 = vrcp.pop %v1524
      %v1529 = vrcp.pop %v1527
      %v1530 = vmul.f32 %v1519, %v1528
      %v1531 = vmul.f32 %v1521, %v1529
      %v1532 = vpack.c.bf16 %v1531, %v1530
      %1533 = vrot.lane.b32.xlu0 %v1192, 80
      %v1534 = vpop.permute.xlu0 %1533
      %v1536 = vsel %vm521, %v1532, 0
      %v1539 = vsel %vm1273, %v1534, 0
      %1541 = vmatprep.subr.bf16.mxu0 0
      %1542 = vmatpush1.bf16.msra.mxu0 %v1539
      %1543 = vmatprep.subr.bf16.mxu0 0
      %1544 = vmatpush1.bf16.msra.mxu0 0
      %1545 = vmatprep.subr.bf16.mxu0 0
      %1546 = vmatpush1.bf16.msra.mxu0 0
      %1547 = vmatprep.subr.bf16.mxu0 0
      %1548 = vmatpush1.bf16.msra.mxu0 0
      %1549 = vmatprep.subr.bf16.mxu0 0
      %1550 = vmatpush1.bf16.msra.mxu0 0
      %1551 = vmatprep.subr.bf16.mxu0 0
      %1552 = vmatpush1.bf16.msra.mxu0 0
      %1553 = vmatprep.subr.bf16.mxu0 0
      %1554 = vmatpush1.bf16.msra.mxu0 0
      %1555 = vmatprep.subr.bf16.mxu0 0
      %1556 = vmatpush1.bf16.msra.mxu0 0
      %1557 = vmatprep.subr.bf16.mxu0 0
      %1558 = vmatpush1.bf16.msra.mxu0 0
      %1559 = vmatprep.subr.bf16.mxu0 0
      %1560 = vmatpush1.bf16.msra.mxu0 0
      %1561 = vmatprep.subr.bf16.mxu0 0
      %1562 = vmatpush1.bf16.msra.mxu0 0
      %1563 = vmatprep.subr.bf16.mxu0 0
      %1564 = vmatpush1.bf16.msra.mxu0 0
      %1565 = vmatprep.subr.bf16.mxu0 0
      %1566 = vmatpush1.bf16.msra.mxu0 0
      %1567 = vmatprep.subr.bf16.mxu0 0
      %1568 = vmatpush1.bf16.msra.mxu0 0
      %1569 = vmatprep.subr.bf16.mxu0 0
      %1570 = vmatpush1.bf16.msra.mxu0 0
      %1571 = vmatprep.subr.bf16.mxu0 0
      %1572 = vmatpush1.bf16.msra.mxu0 0
      %1573 = vmatprep.mubr.bf16.mxu0 0
      %1574 = vmatmul.mubr.bf16.gmra.mrb[0].mxu0 %v1536
      %v1575 = vpop.f32.mrb[0].mxu0
      %v1576 = vadd.f32 0.0, %v1575
      %v1577 = vpop.f32.mrb[0].mxu0
      %v1578 = vpop.f32.mrb[0].mxu0
      %v1579 = vadd.f32 0.0, %v1578
      %v1580 = vpop.f32.mrb[0].mxu0
      %1581 = vdwg.mxu0
      %1584 = vrot.lane.b32.xlu0 %v1576, 16
      %v1585 = vpop.permute.xlu0 %1584
      %1586 = vrot.lane.b32.xlu0 %v1579, 16
      %v1587 = vpop.permute.xlu0 %1586
      %1590 = vst.msk [vmem:[#allocation3] sm:$0xff] %vm866, %v1585
      %vm1591 = vcmask 191616
      %1592 = vst.msk [vmem:[#allocation3 + $0x8] sm:$0xf] %vm1591, %v1587
      %1593 = vrot.lane.b32.xlu0 %v1193, 104
      %v1594 = vpop.permute.xlu0 %1593
      %1595 = vrot.lane.b32.xlu0 %v1192, 104
      %v1596 = vpop.permute.xlu0 %1595
      %v1598 = vsel %vm521, %v1594, 0
      %v1601 = vsel %vm521, %v1596, 0
      %1603 = vmatprep.subr.bf16.mxu0 0
      %1604 = vmatpush1.bf16.xpose.msra.mxu0 %v1601
      %1605 = vmatprep.subr.bf16.mxu0 0
      %1606 = vmatpush1.bf16.xpose.msra.mxu0 0
      %1607 = vmatprep.subr.bf16.mxu0 0
      %1608 = vmatpush1.bf16.xpose.msra.mxu0 0
      %1609 = vmatprep.subr.bf16.mxu0 0
      %1610 = vmatpush1.bf16.xpose.msra.mxu0 0
      %1611 = vmatprep.subr.bf16.mxu0 0
      %1612 = vmatpush1.bf16.xpose.msra.mxu0 0
      %1613 = vmatprep.subr.bf16.mxu0 0
      %1614 = vmatpush1.bf16.xpose.msra.mxu0 0
      %1615 = vmatprep.subr.bf16.mxu0 0
      %1616 = vmatpush1.bf16.xpose.msra.mxu0 0
      %1617 = vmatprep.subr.bf16.mxu0 0
      %1618 = vmatpush1.bf16.xpose.msra.mxu0 0
      %1619 = vmatprep.subr.bf16.mxu0 0
      %1620 = vmatpush1.bf16.xpose.msra.mxu0 0
      %1621 = vmatprep.subr.bf16.mxu0 0
      %1622 = vmatpush1.bf16.xpose.msra.mxu0 0
      %1623 = vmatprep.subr.bf16.mxu0 0
      %1624 = vmatpush1.bf16.xpose.msra.mxu0 0
      %1625 = vmatprep.subr.bf16.mxu0 0
      %1626 = vmatpush1.bf16.xpose.msra.mxu0 0
      %1627 = vmatprep.subr.bf16.mxu0 0
      %1628 = vmatpush1.bf16.xpose.msra.mxu0 0
      %1629 = vmatprep.subr.bf16.mxu0 0
      %1630 = vmatpush1.bf16.xpose.msra.mxu0 0
      %1631 = vmatprep.subr.bf16.mxu0 0
      %1632 = vmatpush1.bf16.xpose.msra.mxu0 0
      %1633 = vmatprep.subr.bf16.mxu0 0
      %1634 = vmatpush1.bf16.xpose.msra.mxu0 0
      %1635 = vmatprep.mubr.bf16.mxu0 0
      %1636 = vmatmul.mubr.bf16.gmra.mrb[0].mxu0 %v1598
      %v1637 = vpop.f32.mrb[0].mxu0
      %v1638 = vadd.f32 0.0, %v1637
      %v1639 = vpop.f32.mrb[0].mxu0
      %v1640 = vpop.f32.mrb[0].mxu0
      %v1641 = vadd.f32 0.0, %v1640
      %v1642 = vpop.f32.mrb[0].mxu0
      %1643 = vdwg.mxu0
      %v1644 = vsel %vm1122, -1e+10, %v1638
      %v1645 = vsel %vm1123, -1e+10, %v1641
      %v1646 = vsel %vm521, %v1644, -inf
      %1647 = vmax.xlane.f32.xlu0 %v1646
      %v1648 = vpop.xlane.xlu0 %1647
      %v1649 = vsel %vm1246, %v1645, -inf
      %1650 = vmax.xlane.f32.xlu0 %v1649
      %v1651 = vpop.xlane.xlu0 %1650
      %v1652 = vsub.f32 %v1644, %v1648
      %v1653 = vsub.f32 %v1645, %v1651
      %v1654 = vmul.f32 %v1652, 1.442695
      %v1655 = vpow.pop %v1654
      %v1656 = vmul.f32 %v1653, 1.442695
      %v1657 = vpow.pop %v1656
      %v1658 = vsel %vm521, %v1655, 0.0
      %1659 = vadd.xlane.f32.xlu0 %v1658
      %v1660 = vpop.xlane.xlu0 %1659
      %v1661 = vsel %vm1246, %v1657, 0.0
      %1662 = vadd.xlane.f32.xlu0 %v1661
      %v1663 = vpop.xlane.xlu0 %1662
      %v1664 = vrcp.pop %v1660
      %v1665 = vrcp.pop %v1663
      %v1666 = vmul.f32 %v1655, %v1664
      %v1667 = vmul.f32 %v1657, %v1665
      %v1668 = vpack.c.bf16 %v1667, %v1666
      %1669 = vrot.lane.b32.xlu0 %v1192, 72
      %v1670 = vpop.permute.xlu0 %1669
      %v1672 = vsel %vm521, %v1668, 0
      %v1675 = vsel %vm1273, %v1670, 0
      %1677 = vmatprep.subr.bf16.mxu0 0
      %1678 = vmatpush1.bf16.msra.mxu0 %v1675
      %1679 = vmatprep.subr.bf16.mxu0 0
      %1680 = vmatpush1.bf16.msra.mxu0 0
      %1681 = vmatprep.subr.bf16.mxu0 0
      %1682 = vmatpush1.bf16.msra.mxu0 0
      %1683 = vmatprep.subr.bf16.mxu0 0
      %1684 = vmatpush1.bf16.msra.mxu0 0
      %1685 = vmatprep.subr.bf16.mxu0 0
      %1686 = vmatpush1.bf16.msra.mxu0 0
      %1687 = vmatprep.subr.bf16.mxu0 0
      %1688 = vmatpush1.bf16.msra.mxu0 0
      %1689 = vmatprep.subr.bf16.mxu0 0
      %1690 = vmatpush1.bf16.msra.mxu0 0
      %1691 = vmatprep.subr.bf16.mxu0 0
      %1692 = vmatpush1.bf16.msra.mxu0 0
      %1693 = vmatprep.subr.bf16.mxu0 0
      %1694 = vmatpush1.bf16.msra.mxu0 0
      %1695 = vmatprep.subr.bf16.mxu0 0
      %1696 = vmatpush1.bf16.msra.mxu0 0
      %1697 = vmatprep.subr.bf16.mxu0 0
      %1698 = vmatpush1.bf16.msra.mxu0 0
      %1699 = vmatprep.subr.bf16.mxu0 0
      %1700 = vmatpush1.bf16.msra.mxu0 0
      %1701 = vmatprep.subr.bf16.mxu0 0
      %1702 = vmatpush1.bf16.msra.mxu0 0
      %1703 = vmatprep.subr.bf16.mxu0 0
      %1704 = vmatpush1.bf16.msra.mxu0 0
      %1705 = vmatprep.subr.bf16.mxu0 0
      %1706 = vmatpush1.bf16.msra.mxu0 0
      %1707 = vmatprep.subr.bf16.mxu0 0
      %1708 = vmatpush1.bf16.msra.mxu0 0
      %1709 = vmatprep.mubr.bf16.mxu0 0
      %1710 = vmatmul.mubr.bf16.gmra.mrb[0].mxu0 %v1672
      %v1711 = vpop.f32.mrb[0].mxu0
      %v1712 = vadd.f32 0.0, %v1711
      %v1713 = vpop.f32.mrb[0].mxu0
      %v1714 = vpop.f32.mrb[0].mxu0
      %v1715 = vadd.f32 0.0, %v1714
      %v1716 = vpop.f32.mrb[0].mxu0
      %1717 = vdwg.mxu0
      %1720 = vrot.lane.b32.xlu0 %v1712, 24
      %v1721 = vpop.permute.xlu0 %1720
      %1722 = vrot.lane.b32.xlu0 %v1715, 24
      %v1723 = vpop.permute.xlu0 %1722
      %1726 = vst.msk [vmem:[#allocation3] sm:$0xff] %vm983, %v1721
      %vm1727 = vcmask 257216
      %1728 = vst.msk [vmem:[#allocation3 + $0x8] sm:$0xf] %vm1727, %v1723
      %v1729 = vld [vmem:[#allocation3] sm:$0xff]
      %v1730 = vld [vmem:[#allocation3 + $0x8] sm:$0xf]
      %v1731 = vadd.f32 %v1104, %v1729
      %v1732 = vadd.f32 %v1107, %v1730
      %v1733 = vpack.c.bf16 %v1732, %v1731
      %v1738 = vunpack.c.l.b16 %v1129
      %v1739 = vunpack.c.l.b16 %v1130
      %v1740 = vunpack.c.l.b16 %v1131
      %v1741 = vunpack.c.l.b16 %v1132
      %v1742 = vpack.c.b16 %v1739, %v1738
      %v1743 = vpack.c.b16 %v1741, %v1740
      %1746 = vrot.lane.b32.xlu0 %v1058, 32
      %v1747 = vpop.permute.xlu0 %1746
      %v1750 = vsel %vm1003, %v1733, 0
      %1752 = vmatprep.subr.bf16.mxu0 0
      %1753 = vmatpush1.bf16.msra.mxu0 %v1742
      %1754 = vmatprep.subr.bf16.mxu0 0
      %1755 = vmatpush1.bf16.msra.mxu0 %v1743
      %1756 = vmatprep.subr.bf16.mxu0 0
      %1757 = vmatpush1.bf16.msra.mxu0 0
      %1758 = vmatprep.subr.bf16.mxu0 0
      %1759 = vmatpush1.bf16.msra.mxu0 0
      %1760 = vmatprep.subr.bf16.mxu0 0
      %1761 = vmatpush1.bf16.msra.mxu0 0
      %1762 = vmatprep.subr.bf16.mxu0 0
      %1763 = vmatpush1.bf16.msra.mxu0 0
      %1764 = vmatprep.subr.bf16.mxu0 0
      %1765 = vmatpush1.bf16.msra.mxu0 0
      %1766 = vmatprep.subr.bf16.mxu0 0
      %1767 = vmatpush1.bf16.msra.mxu0 0
      %1768 = vmatprep.subr.bf16.mxu0 0
      %1769 = vmatpush1.bf16.msra.mxu0 0
      %1770 = vmatprep.subr.bf16.mxu0 0
      %1771 = vmatpush1.bf16.msra.mxu0 0
      %1772 = vmatprep.subr.bf16.mxu0 0
      %1773 = vmatpush1.bf16.msra.mxu0 0
      %1774 = vmatprep.subr.bf16.mxu0 0
      %1775 = vmatpush1.bf16.msra.mxu0 0
      %1776 = vmatprep.subr.bf16.mxu0 0
      %1777 = vmatpush1.bf16.msra.mxu0 0
      %1778 = vmatprep.subr.bf16.mxu0 0
      %1779 = vmatpush1.bf16.msra.mxu0 0
      %1780 = vmatprep.subr.bf16.mxu0 0
      %1781 = vmatpush1.bf16.msra.mxu0 0
      %1782 = vmatprep.subr.bf16.mxu0 0
      %1783 = vmatpush1.bf16.msra.mxu0 0
      %1784 = vmatprep.mubr.bf16.mxu0 0
      %1785 = vmatmul.mubr.bf16.gmra.mrb[0].mxu0 %v1750
      %v1786 = vpop.f32.mrb[0].mxu0
      %v1787 = vadd.f32 %v1747, %v1786
      %v1788 = vpop.f32.mrb[0].mxu0
      %v1789 = vpop.f32.mrb[0].mxu0
      %v1790 = vadd.f32 %v1747, %v1789
      %v1791 = vpop.f32.mrb[0].mxu0
      %1792 = vdwg.mxu0
      %v1793 = vmax.f32 %v1787, 0.0
      %v1794 = vmax.f32 %v1790, 0.0
      %v1795 = vadd.f32 %v1731, %v1793
      %v1796 = vadd.f32 %v1732, %v1794
      %1797 = vst.msk [vmem:[%s440] sm:$0xff] %vm1003, %v1795
      %vm1798 = vcmask 257024
      %1799 = vst.msk [vmem:[%s440 + $0x8] sm:$0xf] %vm1798, %v1796
      %p1800 = scmp.lt.s32.totalorder %s22, 1
      %s1801 = scalar_select %p1800, %s22, 1
      %s1802 = smul.addr %s1801, 2
      %s1803 = smul.addr %s1802, 8
      %s1804 = scalar_lea.vmem %s11, %s1803
      // Predicated region
      $region65: #{imab_forward.1} parent=63 // pred_check
        %p1805 = pneg %p291
      $region66: #{imab_forward.1} parent=63 // pred_check_branch
        %1807 = sbr.rel (%p1805) target = $region68
      $region67: #{imab_forward.1} parent=63 // pred_region
        _
      $region68: #{imab_forward.1} parent=63 // pred_fallthru
        _
    $region64: #{imab_forward.1} parent=5 // pred_fallthru
      _
    %p1808 = scmp.le.s32.totalorder 2, %s17
    // Predicated region
    $region69: #{imab_forward.1} parent=5 // pred_check
      %p1809 = pneg %p1808
    $region70: #{imab_forward.1} parent=5 // pred_check_branch
      %1811 = sbr.rel (%p1809) target = $region72
    $region71: #{imab_forward.1} parent=5 // pred_region
      %s1812 = ssub.s32 %s17, 2
      // Predicated region
      $region73: #{imab_forward.1} parent=71 // pred_check
        %p1813 = pneg %p297
      $region74: #{imab_forward.1} parent=71 // pred_check_branch
        %1815 = sbr.rel (%p1813) target = $region76
      $region75: #{imab_forward.1} parent=71 // pred_region
        %p1816 = scmp.lt.s32.totalorder %s23, 1
        %s1817 = scalar_select %p1816, %s23, 1
        %s1818 = smul.addr %s1817, 2
        %s1819 = smul.addr %s1818, 8
        %s1820 = scalar_lea.vmem %s11, %s1819
      $region76: #{imab_forward.1} parent=71 // pred_fallthru
        _
    $region72: #{imab_forward.1} parent=5 // pred_fallthru
      _
  $region6: #{imab_forward.1} parent=0 // loop_footer
    %s21 = sadd.s32 1, %s17
  $region7: #{imab_forward.1} parent=0 // loop_footer_branch
    %16 = sbr.rel target = $region3
  $region8: #{imab_forward.1} parent=0 // loop_exit
    _

</llo_original>
